<compile_context>
chip_gen: v7x
topology: tpu7x:2x2x1
jax: 0.10.0
libtpu: 0.0.40
codegen_flags: <defaults>
</compile_context>

<pallas_src>
import jax
import jax.numpy as jnp
import numpy as np
from jax.experimental import pallas as pl
from jax.experimental.pallas import tpu as pltpu


def _elu(z):
    # F.elu, alpha=1
    return jnp.where(z > 0.0, z, jnp.exp(jnp.minimum(z, 0.0)) - 1.0)


def _round_up(x, m):
    return ((x + m - 1) // m) * m


# --------------------------------------------------------------------------------------
# Kernel A: GATConv1 (both edge sets) + GATConv2 (plain linear) + decoder, per dst-row tile
# --------------------------------------------------------------------------------------
def _gat_dec_kernel(xw1_ref, a_src_ref, a_dst_ref, adj_pos_ref, adj_csl_ref,
                    w2_ref, wd1_ref, bd1_ref, wd2_ref, bd2_ref,
                    h2_ref, h2n_ref, rec_ref):
    hidden = w2_ref.shape[0]

    xw1 = xw1_ref[...]                       # (N_pad, hidden+1)  == [x@W1 | 1]  (resident)
    a_src = a_src_ref[...]                   # (1, N_pad)         source logits (resident)
    a_dst = a_dst_ref[...]                   # (tile_m, 1)        dst logits for this tile

    # sigmoid attention logit for every (dst-in-tile, src) pair.
    # sigmoid via tanh: one EUP op on the O(N^2) slab instead of exp + reciprocal.
    z = a_dst + a_src                        # (tile_m, N_pad)
    e = 0.5 + 0.5 * jnp.tanh(0.5 * z)
    # e in (0,1): exp never overflows -> no mask / max-shift needed. Shared by both edge sets.
    q = jnp.exp(e)                           # (tile_m, N_pad)

    def aggregate(adj_ref):
        # adj==0 already masks non-edges; adj carries edge multiplicity.
        p = adj_ref[...].astype(jnp.float32) * q                       # (tile_m, N_pad)
        # One MXU pass produces both the weighted sum and (via the ones column) the denominator.
        nd = jnp.dot(p, xw1, preferred_element_type=jnp.float32)       # (tile_m, hidden+1)
        num = nd[:, :hidden]
        den = nd[:, hidden:hidden + 1]
        # den >= 1 whenever the node has any in-edge; floor only protects empty rows (-> 0).
        inv = pl.reciprocal(jnp.maximum(den, 1e-6), approx=True)
        return _elu(num * inv)                                         # (tile_m, hidden)

    h1 = aggregate(adj_pos_ref)
    h1n = aggregate(adj_csl_ref)

    # GATConv2 with attention=False == plain linear (heads=1, concat=False, no bias).
    # Two small dots instead of a concat + one dot: same MXU work, no VMEM copies.
    w2 = w2_ref[...]
    h2 = jnp.dot(h1, w2, preferred_element_type=jnp.float32)           # (tile_m, out_dim)
    h2n = jnp.dot(h1n, w2, preferred_element_type=jnp.float32)

    # decoder: rec = dec2(elu(dec1(h2)))
    r = _elu(jnp.dot(h2, wd1_ref[...], preferred_element_type=jnp.float32) + bd1_ref[...])
    rec = jnp.dot(r, wd2_ref[...], preferred_element_type=jnp.float32) + bd2_ref[...]

    h2_ref[...] = h2
    h2n_ref[...] = h2n
    rec_ref[...] = rec


# --------------------------------------------------------------------------------------
# Kernel B: CSL scatter_mean  h_pos[i] = (1/deg_i) * sum_j cnt[i,j] * h2[j]
# --------------------------------------------------------------------------------------
def _csl_kernel(cnt_ref, h2_ref, inv_deg_ref, out_ref):
    cnt = cnt_ref[...].astype(jnp.float32)                              # (tile_m, N_pad)
    hs = jnp.dot(cnt, h2_ref[...], preferred_element_type=jnp.float32)  # (tile_m, out_dim)
    out_ref[...] = hs * inv_deg_ref[...]


# --------------------------------------------------------------------------------------
# Wrapper
# --------------------------------------------------------------------------------------
def spatial_msi_forward(features, edge_index, edge_csl, params, *, tile_m=128):
    assert tile_m % 128 == 0, "tile_m must be a multiple of 128 (lane/sublane friendly)"
    N, in_dim = features.shape
    hidden = params["w1"].shape[1]
    out_dim = params["w2"].shape[1]
    N_pad = _round_up(N, tile_m)
    grid = (N_pad // tile_m,)

    f32 = jnp.float32
    x = features.astype(f32)

    # ---- dense graph structure (bf16: edge counts are small ints -> exact) ----
    def dense_adj(ei):
        # adj[dst, src] = #edges src->dst
        a = jnp.zeros((N_pad, N_pad), f32).at[ei[1], ei[0]].add(1.0)
        return a.astype(jnp.bfloat16)

    adj_pos = dense_adj(edge_index)
    adj_csl = dense_adj(edge_csl)
    # cnt[src, dst] = #edges src->dst   (scatter_mean grouped by edge_index[0])
    cnt = (jnp.zeros((N_pad, N_pad), f32)
           .at[edge_index[0], edge_index[1]].add(1.0)).astype(jnp.bfloat16)

    # out-degree from the edge list (O(E)), not an O(N^2) reduce in-kernel
    deg = jax.ops.segment_sum(jnp.ones((edge_index.shape[1],), f32),
                              edge_index[0], num_segments=N)
    inv_deg = (1.0 / jnp.maximum(deg, 1.0)).reshape(N, 1)

    # ---- packed GATConv1 projection: one matmul gives xw, a_dst, a_src ----
    w1, att_s, att_d = params["w1"], params["att_src"], params["att_dst"]
    w_pack = jnp.concatenate([w1, w1 @ att_d, w1 @ att_s.T], axis=1)   # (in_dim, hidden+2)
    proj = x @ w_pack                                                  # (N, hidden+2)
    xw = proj[:, :hidden]
    a_dst = proj[:, hidden:hidden + 1]
    a_src = proj[:, hidden + 1:hidden + 2]
    xw1 = jnp.concatenate([xw, jnp.ones((N, 1), f32)], axis=1)         # (N, hidden+1)

    rpad = ((0, N_pad - N), (0, 0))
    xw1_p = jnp.pad(xw1, rpad)                                         # (N_pad, hidden+1)
    a_dst_p = jnp.pad(a_dst, rpad)                                     # (N_pad, 1)
    a_src_row = jnp.pad(a_src, rpad).T                                 # (1, N_pad)
    inv_deg_p = jnp.pad(inv_deg, rpad)                                 # (N_pad, 1)

    cparams = pltpu.CompilerParams(
        dimension_semantics=("parallel",),          # shards row tiles across TCs on v7x
        vmem_limit_bytes=64 * 1024 * 1024,
    )

    h2_p, h2n_p, rec_p = pl.pallas_call(
        _gat_dec_kernel,
        out_shape=(
            jax.ShapeDtypeStruct((N_pad, out_dim), f32),
            jax.ShapeDtypeStruct((N_pad, out_dim), f32),
            jax.ShapeDtypeStruct((N_pad, in_dim), f32),
        ),
        grid=grid,
        in_specs=[
            pl.BlockSpec((N_pad, hidden + 1), lambda i: (0, 0)),   # xw1 (resident)
            pl.BlockSpec((1, N_pad), lambda i: (0, 0)),            # a_src row (resident)
            pl.BlockSpec((tile_m, 1), lambda i: (i, 0)),           # a_dst tile
            pl.BlockSpec((tile_m, N_pad), lambda i: (i, 0)),       # adj_pos tile (bf16)
            pl.BlockSpec((tile_m, N_pad), lambda i: (i, 0)),       # adj_csl tile (bf16)
            pl.BlockSpec((hidden, out_dim), lambda i: (0, 0)),     # w2
            pl.BlockSpec((out_dim, hidden), lambda i: (0, 0)),     # wd1
            pl.BlockSpec((1, hidden), lambda i: (0, 0)),           # bd1
            pl.BlockSpec((hidden, in_dim), lambda i: (0, 0)),      # wd2
            pl.BlockSpec((1, in_dim), lambda i: (0, 0)),           # bd2
        ],
        out_specs=(
            pl.BlockSpec((tile_m, out_dim), lambda i: (i, 0)),     # h2
            pl.BlockSpec((tile_m, out_dim), lambda i: (i, 0)),     # h2_neg
            pl.BlockSpec((tile_m, in_dim), lambda i: (i, 0)),      # rec
        ),
        compiler_params=cparams,
    )(xw1_p, a_src_row, a_dst_p, adj_pos, adj_csl,
      params["w2"], params["wd1"], params["bd1"], params["wd2"], params["bd2"])

    hpos_p = pl.pallas_call(
        _csl_kernel,
        out_shape=jax.ShapeDtypeStruct((N_pad, out_dim), f32),
        grid=grid,
        in_specs=[
            pl.BlockSpec((tile_m, N_pad), lambda i: (i, 0)),       # cnt tile (bf16)
            pl.BlockSpec((N_pad, out_dim), lambda i: (0, 0)),      # h2 (resident; pad rows = 0)
            pl.BlockSpec((tile_m, 1), lambda i: (i, 0)),           # 1/out-degree tile
        ],
        out_specs=pl.BlockSpec((tile_m, out_dim), lambda i: (i, 0)),
        compiler_params=cparams,
    )(cnt, h2_p, inv_deg_p)

    return h2_p[:N], hpos_p[:N], h2n_p[:N], rec_p[:N]


# --------------------------------------------------------------------------------------
# pure-JAX reference (original masked-softmax formulation) for a sanity check
# --------------------------------------------------------------------------------------
def _reference(features, edge_index, edge_csl, params):
    N, _ = features.shape
    w1, att_s, att_d = params["w1"], params["att_src"], params["att_dst"]
    w2 = params["w2"]

    def dense_adj(ei):
        return jnp.zeros((N, N), jnp.float32).at[ei[1], ei[0]].add(1.0)

    xw = features @ w1
    a_dst = xw @ att_d
    a_src_row = (xw @ att_s.T).T
    e = 1.0 / (1.0 + jnp.exp(-(a_dst + a_src_row)))

    def gat(adj):
        e_m = jnp.where(adj > 0, e, -1e30)
        p = adj * jnp.exp(e_m - jnp.max(e_m, axis=1, keepdims=True))
        attn = p / jnp.maximum(jnp.sum(p, axis=1, keepdims=True), 1e-16)
        return attn @ xw

    h1, h1n = _elu(gat(dense_adj(edge_index))), _elu(gat(dense_adj(edge_csl)))
    h2, h2n = h1 @ w2, h1n @ w2
    rec = _elu(h2 @ params["wd1"] + params["bd1"]) @ params["wd2"] + params["bd2"]
    cnt = jnp.zeros((N, N), jnp.float32).at[edge_index[0], edge_index[1]].add(1.0)
    hpos = (cnt @ h2) / jnp.maximum(jnp.sum(cnt, axis=1, keepdims=True), 1.0)
    return h2, hpos, h2n, rec


if __name__ == "__main__":
    # small shapes: N nodes, hidden_dims = [in_dim, num_hidden, out_dim]
    N, E = 16, 48
    in_dim, num_hidden, out_dim = 32, 16, 8

    key = jax.random.PRNGKey(0)
    ks = jax.random.split(key, 14)
    scale = 0.1
    params = dict(
        w1=scale * jax.random.normal(ks[0], (in_dim, num_hidden), jnp.float32),
        att_src=scale * jax.random.normal(ks[1], (1, num_hidden), jnp.float32),
        att_dst=scale * jax.random.normal(ks[2], (num_hidden, 1), jnp.float32),
        w2=scale * jax.random.normal(ks[3], (num_hidden, out_dim), jnp.float32),
        wd1=scale * jax.random.normal(ks[4], (out_dim, num_hidden), jnp.float32),
        bd1=scale * jax.random.normal(ks[5], (1, num_hidden), jnp.float32),
        wd2=scale * jax.random.normal(ks[6], (num_hidden, in_dim), jnp.float32),
        bd2=scale * jax.random.normal(ks[7], (1, in_dim), jnp.float32),
    )

    features = jax.random.normal(ks[8], (N, in_dim), jnp.float32)
    edge_index = jnp.stack([
        jax.random.randint(ks[9], (E,), 0, N),
        jax.random.randint(ks[10], (E,), 0, N),
    ]).astype(jnp.int32)
    edge_csl = jnp.stack([
        jax.random.randint(ks[11], (E,), 0, N),
        jax.random.randint(ks[12], (E,), 0, N),
    ]).astype(jnp.int32)

    outs = spatial_msi_forward(features, edge_index, edge_csl, params)
    outs = jax.block_until_ready(outs)

    refs = _reference(features, edge_index, edge_csl, params)
    for o, r in zip(outs, refs):
        assert np.all(np.isfinite(np.asarray(o)))
        np.testing.assert_allclose(np.asarray(o), np.asarray(r), rtol=1e-2, atol=1e-2)

    print("KERNEL_OK")
</pallas_src>

<mosaic_0001>
module attributes {stable_mosaic.version = 11 : i64} {
  func.func @_gat_dec_kernel(%arg0: i32, %arg1: memref<128x17xf32, #tpu.memory_space<vmem>>, %arg2: memref<1x128xf32, #tpu.memory_space<vmem>>, %arg3: memref<128x1xf32, #tpu.memory_space<vmem>>, %arg4: memref<128x128xbf16, #tpu.memory_space<vmem>>, %arg5: memref<128x128xbf16, #tpu.memory_space<vmem>>, %arg6: memref<16x8xf32, #tpu.memory_space<vmem>>, %arg7: memref<8x16xf32, #tpu.memory_space<vmem>>, %arg8: memref<1x16xf32, #tpu.memory_space<vmem>>, %arg9: memref<16x32xf32, #tpu.memory_space<vmem>>, %arg10: memref<1x32xf32, #tpu.memory_space<vmem>>, %arg11: memref<128x8xf32, #tpu.memory_space<vmem>>, %arg12: memref<128x8xf32, #tpu.memory_space<vmem>>, %arg13: memref<128x32xf32, #tpu.memory_space<vmem>>) attributes {dimension_semantics = [#tpu.dimension_semantics<parallel>], iteration_bounds = array<i64: 1>, scalar_prefetch = 0 : i64, scratch_operands = 0 : i64, tpu.core_type = #tpu.core_type<tc>, window_params = [{pipeline_mode = #tpu.pipeline_mode<synchronous>, transform_indices = @transform_0, window_bounds = array<i64: 128, 17>}, {pipeline_mode = #tpu.pipeline_mode<synchronous>, transform_indices = @transform_1, window_bounds = array<i64: 1, 128>}, {transform_indices = @transform_2, window_bounds = array<i64: 128, 1>}, {transform_indices = @transform_3, window_bounds = array<i64: 128, 128>}, {transform_indices = @transform_4, window_bounds = array<i64: 128, 128>}, {pipeline_mode = #tpu.pipeline_mode<synchronous>, transform_indices = @transform_5, window_bounds = array<i64: 16, 8>}, {pipeline_mode = #tpu.pipeline_mode<synchronous>, transform_indices = @transform_6, window_bounds = array<i64: 8, 16>}, {pipeline_mode = #tpu.pipeline_mode<synchronous>, transform_indices = @transform_7, window_bounds = array<i64: 1, 16>}, {pipeline_mode = #tpu.pipeline_mode<synchronous>, transform_indices = @transform_8, window_bounds = array<i64: 16, 32>}, {pipeline_mode = #tpu.pipeline_mode<synchronous>, transform_indices = @transform_9, window_bounds = array<i64: 1, 32>}, {transform_indices = @transform_10, window_bounds = array<i64: 128, 8>}, {transform_indices = @transform_11, window_bounds = array<i64: 128, 8>}, {transform_indices = @transform_12, window_bounds = array<i64: 128, 32>}]} {
    %c0 = arith.constant 0 : index
    %c0_0 = arith.constant 0 : index
    %0 = vector.load %arg1[%c0, %c0_0] : memref<128x17xf32, #tpu.memory_space<vmem>>, vector<128x17xf32>
    %c0_1 = arith.constant 0 : index
    %c0_2 = arith.constant 0 : index
    %1 = vector.load %arg2[%c0_1, %c0_2] : memref<1x128xf32, #tpu.memory_space<vmem>>, vector<1x128xf32>
    %c0_3 = arith.constant 0 : index
    %c0_4 = arith.constant 0 : index
    %2 = vector.load %arg3[%c0_3, %c0_4] : memref<128x1xf32, #tpu.memory_space<vmem>>, vector<128x1xf32>
    %3 = vector.broadcast %2 : vector<128x1xf32> to vector<128x128xf32>
    %4 = vector.broadcast %1 : vector<1x128xf32> to vector<128x128xf32>
    %5 = arith.addf %3, %4 : vector<128x128xf32>
    %cst = arith.constant 5.000000e-01 : f32
    %6 = vector.broadcast %cst : f32 to vector<128x128xf32>
    %7 = arith.mulf %6, %5 : vector<128x128xf32>
    %8 = math.tanh %7 : vector<128x128xf32>
    %cst_5 = arith.constant 5.000000e-01 : f32
    %9 = vector.broadcast %cst_5 : f32 to vector<128x128xf32>
    %10 = arith.mulf %9, %8 : vector<128x128xf32>
    %cst_6 = arith.constant 5.000000e-01 : f32
    %11 = vector.broadcast %cst_6 : f32 to vector<128x128xf32>
    %12 = arith.addf %11, %10 : vector<128x128xf32>
    %13 = math.exp %12 : vector<128x128xf32>
    %c0_7 = arith.constant 0 : index
    %c0_8 = arith.constant 0 : index
    %14 = vector.load %arg4[%c0_7, %c0_8] : memref<128x128xbf16, #tpu.memory_space<vmem>>, vector<128x128xbf16>
    %15 = arith.extf %14 : vector<128x128xbf16> to vector<128x128xf32>
    %16 = arith.mulf %15, %13 : vector<128x128xf32>
    %cst_9 = arith.constant dense<0.000000e+00> : vector<128x17xf32>
    %17 = tpu.matmul %16, %0, %cst_9 {dimension_numbers = #tpu.dot_dimension_numbers<[1], [0], [0], [1], [0, 0, 1, 1], [], []>} : vector<128x128xf32>, vector<128x17xf32>, vector<128x17xf32> -> vector<128x17xf32>
    %18 = vector.extract_strided_slice %17 {offsets = [0, 0], sizes = [128, 16], strides = [1, 1]} : vector<128x17xf32> to vector<128x16xf32>
    %19 = vector.extract_strided_slice %17 {offsets = [0, 16], sizes = [128, 1], strides = [1, 1]} : vector<128x17xf32> to vector<128x1xf32>
    %cst_10 = arith.constant 9.99999997E-7 : f32
    %20 = vector.broadcast %cst_10 : f32 to vector<128x1xf32>
    %21 = arith.maximumf %19, %20 : vector<128x1xf32>
    %22 = tpu.reciprocal %21 {approx = true} : vector<128x1xf32> -> vector<128x1xf32>
    %23 = vector.broadcast %22 : vector<128x1xf32> to vector<128x16xf32>
    %24 = arith.mulf %18, %23 : vector<128x16xf32>
    %cst_11 = arith.constant 0.000000e+00 : f32
    %25 = vector.broadcast %cst_11 : f32 to vector<128x16xf32>
    %26 = arith.cmpf ogt, %24, %25 : vector<128x16xf32>
    %cst_12 = arith.constant 0.000000e+00 : f32
    %27 = vector.broadcast %cst_12 : f32 to vector<128x16xf32>
    %28 = arith.minimumf %24, %27 : vector<128x16xf32>
    %29 = math.exp %28 : vector<128x16xf32>
    %cst_13 = arith.constant 1.000000e+00 : f32
    %30 = vector.broadcast %cst_13 : f32 to vector<128x16xf32>
    %31 = arith.subf %29, %30 : vector<128x16xf32>
    %32 = arith.select %26, %24, %31 : vector<128x16xi1>, vector<128x16xf32>
    %c0_14 = arith.constant 0 : index
    %c0_15 = arith.constant 0 : index
    %33 = vector.load %arg5[%c0_14, %c0_15] : memref<128x128xbf16, #tpu.memory_space<vmem>>, vector<128x128xbf16>
    %34 = arith.extf %33 : vector<128x128xbf16> to vector<128x128xf32>
    %35 = arith.mulf %34, %13 : vector<128x128xf32>
    %cst_16 = arith.constant dense<0.000000e+00> : vector<128x17xf32>
    %36 = tpu.matmul %35, %0, %cst_16 {dimension_numbers = #tpu.dot_dimension_numbers<[1], [0], [0], [1], [0, 0, 1, 1], [], []>} : vector<128x128xf32>, vector<128x17xf32>, vector<128x17xf32> -> vector<128x17xf32>
    %37 = vector.extract_strided_slice %36 {offsets = [0, 0], sizes = [128, 16], strides = [1, 1]} : vector<128x17xf32> to vector<128x16xf32>
    %38 = vector.extract_strided_slice %36 {offsets = [0, 16], sizes = [128, 1], strides = [1, 1]} : vector<128x17xf32> to vector<128x1xf32>
    %cst_17 = arith.constant 9.99999997E-7 : f32
    %39 = vector.broadcast %cst_17 : f32 to vector<128x1xf32>
    %40 = arith.maximumf %38, %39 : vector<128x1xf32>
    %41 = tpu.reciprocal %40 {approx = true} : vector<128x1xf32> -> vector<128x1xf32>
    %42 = vector.broadcast %41 : vector<128x1xf32> to vector<128x16xf32>
    %43 = arith.mulf %37, %42 : vector<128x16xf32>
    %cst_18 = arith.constant 0.000000e+00 : f32
    %44 = vector.broadcast %cst_18 : f32 to vector<128x16xf32>
    %45 = arith.cmpf ogt, %43, %44 : vector<128x16xf32>
    %cst_19 = arith.constant 0.000000e+00 : f32
    %46 = vector.broadcast %cst_19 : f32 to vector<128x16xf32>
    %47 = arith.minimumf %43, %46 : vector<128x16xf32>
    %48 = math.exp %47 : vector<128x16xf32>
    %cst_20 = arith.constant 1.000000e+00 : f32
    %49 = vector.broadcast %cst_20 : f32 to vector<128x16xf32>
    %50 = arith.subf %48, %49 : vector<128x16xf32>
    %51 = arith.select %45, %43, %50 : vector<128x16xi1>, vector<128x16xf32>
    %c0_21 = arith.constant 0 : index
    %c0_22 = arith.constant 0 : index
    %52 = vector.load %arg6[%c0_21, %c0_22] : memref<16x8xf32, #tpu.memory_space<vmem>>, vector<16x8xf32>
    %cst_23 = arith.constant dense<0.000000e+00> : vector<128x8xf32>
    %53 = tpu.matmul %32, %52, %cst_23 {dimension_numbers = #tpu.dot_dimension_numbers<[1], [0], [0], [1], [0, 0, 1, 1], [], []>} : vector<128x16xf32>, vector<16x8xf32>, vector<128x8xf32> -> vector<128x8xf32>
    %cst_24 = arith.constant dense<0.000000e+00> : vector<128x8xf32>
    %54 = tpu.matmul %51, %52, %cst_24 {dimension_numbers = #tpu.dot_dimension_numbers<[1], [0], [0], [1], [0, 0, 1, 1], [], []>} : vector<128x16xf32>, vector<16x8xf32>, vector<128x8xf32> -> vector<128x8xf32>
    %c0_25 = arith.constant 0 : index
    %c0_26 = arith.constant 0 : index
    %55 = vector.load %arg7[%c0_25, %c0_26] : memref<8x16xf32, #tpu.memory_space<vmem>>, vector<8x16xf32>
    %cst_27 = arith.constant dense<0.000000e+00> : vector<128x16xf32>
    %56 = tpu.matmul %53, %55, %cst_27 {dimension_numbers = #tpu.dot_dimension_numbers<[1], [0], [0], [1], [0, 0, 1, 1], [], []>} : vector<128x8xf32>, vector<8x16xf32>, vector<128x16xf32> -> vector<128x16xf32>
    %c0_28 = arith.constant 0 : index
    %c0_29 = arith.constant 0 : index
    %57 = vector.load %arg8[%c0_28, %c0_29] : memref<1x16xf32, #tpu.memory_space<vmem>>, vector<1x16xf32>
    %58 = vector.broadcast %57 : vector<1x16xf32> to vector<128x16xf32>
    %59 = arith.addf %56, %58 : vector<128x16xf32>
    %cst_30 = arith.constant 0.000000e+00 : f32
    %60 = vector.broadcast %cst_30 : f32 to vector<128x16xf32>
    %61 = arith.cmpf ogt, %59, %60 : vector<128x16xf32>
    %cst_31 = arith.constant 0.000000e+00 : f32
    %62 = vector.broadcast %cst_31 : f32 to vector<128x16xf32>
    %63 = arith.minimumf %59, %62 : vector<128x16xf32>
    %64 = math.exp %63 : vector<128x16xf32>
    %cst_32 = arith.constant 1.000000e+00 : f32
    %65 = vector.broadcast %cst_32 : f32 to vector<128x16xf32>
    %66 = arith.subf %64, %65 : vector<128x16xf32>
    %67 = arith.select %61, %59, %66 : vector<128x16xi1>, vector<128x16xf32>
    %c0_33 = arith.constant 0 : index
    %c0_34 = arith.constant 0 : index
    %68 = vector.load %arg9[%c0_33, %c0_34] : memref<16x32xf32, #tpu.memory_space<vmem>>, vector<16x32xf32>
    %cst_35 = arith.constant dense<0.000000e+00> : vector<128x32xf32>
    %69 = tpu.matmul %67, %68, %cst_35 {dimension_numbers = #tpu.dot_dimension_numbers<[1], [0], [0], [1], [0, 0, 1, 1], [], []>} : vector<128x16xf32>, vector<16x32xf32>, vector<128x32xf32> -> vector<128x32xf32>
    %c0_36 = arith.constant 0 : index
    %c0_37 = arith.constant 0 : index
    %70 = vector.load %arg10[%c0_36, %c0_37] : memref<1x32xf32, #tpu.memory_space<vmem>>, vector<1x32xf32>
    %71 = vector.broadcast %70 : vector<1x32xf32> to vector<128x32xf32>
    %72 = arith.addf %69, %71 : vector<128x32xf32>
    %c0_38 = arith.constant 0 : index
    %c0_39 = arith.constant 0 : index
    %73 = vector.load %arg11[%c0_38, %c0_39] : memref<128x8xf32, #tpu.memory_space<vmem>>, vector<128x8xf32>
    tpu.vector_store %arg11[%c0_38, %c0_39], %53 {strides = array<i32>} : memref<128x8xf32, #tpu.memory_space<vmem>>, vector<128x8xf32>,
    %c0_40 = arith.constant 0 : index
    %c0_41 = arith.constant 0 : index
    %74 = vector.load %arg12[%c0_40, %c0_41] : memref<128x8xf32, #tpu.memory_space<vmem>>, vector<128x8xf32>
    tpu.vector_store %arg12[%c0_40, %c0_41], %54 {strides = array<i32>} : memref<128x8xf32, #tpu.memory_space<vmem>>, vector<128x8xf32>,
    %c0_42 = arith.constant 0 : index
    %c0_43 = arith.constant 0 : index
    %75 = vector.load %arg13[%c0_42, %c0_43] : memref<128x32xf32, #tpu.memory_space<vmem>>, vector<128x32xf32>
    tpu.vector_store %arg13[%c0_42, %c0_43], %72 {strides = array<i32>} : memref<128x32xf32, #tpu.memory_space<vmem>>, vector<128x32xf32>,
    return
  }
  func.func @transform_0(%arg0: i32) -> (i32, i32) {
    %c0_i32 = arith.constant 0 : i32
    %c0_i32_0 = arith.constant 0 : i32
    %c0_i32_1 = arith.constant 0 : i32
    return %c0_i32, %c0_i32_0 : i32, i32
  }
  func.func @transform_1(%arg0: i32) -> (i32, i32) {
    %c0_i32 = arith.constant 0 : i32
    %c0_i32_0 = arith.constant 0 : i32
    %c0_i32_1 = arith.constant 0 : i32
    return %c0_i32, %c0_i32_0 : i32, i32
  }
  func.func @transform_2(%arg0: i32) -> (i32, i32) {
    %c0_i32 = arith.constant 0 : i32
    %c0_i32_0 = arith.constant 0 : i32
    return %arg0, %c0_i32 : i32, i32
  }
  func.func @transform_3(%arg0: i32) -> (i32, i32) {
    %c0_i32 = arith.constant 0 : i32
    %c0_i32_0 = arith.constant 0 : i32
    return %arg0, %c0_i32 : i32, i32
  }
  func.func @transform_4(%arg0: i32) -> (i32, i32) {
    %c0_i32 = arith.constant 0 : i32
    %c0_i32_0 = arith.constant 0 : i32
    return %arg0, %c0_i32 : i32, i32
  }
  func.func @transform_5(%arg0: i32) -> (i32, i32) {
    %c0_i32 = arith.constant 0 : i32
    %c0_i32_0 = arith.constant 0 : i32
    %c0_i32_1 = arith.constant 0 : i32
    return %c0_i32, %c0_i32_0 : i32, i32
  }
  func.func @transform_6(%arg0: i32) -> (i32, i32) {
    %c0_i32 = arith.constant 0 : i32
    %c0_i32_0 = arith.constant 0 : i32
    %c0_i32_1 = arith.constant 0 : i32
    return %c0_i32, %c0_i32_0 : i32, i32
  }
  func.func @transform_7(%arg0: i32) -> (i32, i32) {
    %c0_i32 = arith.constant 0 : i32
    %c0_i32_0 = arith.constant 0 : i32
    %c0_i32_1 = arith.constant 0 : i32
    return %c0_i32, %c0_i32_0 : i32, i32
  }
  func.func @transform_8(%arg0: i32) -> (i32, i32) {
    %c0_i32 = arith.constant 0 : i32
    %c0_i32_0 = arith.constant 0 : i32
    %c0_i32_1 = arith.constant 0 : i32
    return %c0_i32, %c0_i32_0 : i32, i32
  }
  func.func @transform_9(%arg0: i32) -> (i32, i32) {
    %c0_i32 = arith.constant 0 : i32
    %c0_i32_0 = arith.constant 0 : i32
    %c0_i32_1 = arith.constant 0 : i32
    return %c0_i32, %c0_i32_0 : i32, i32
  }
  func.func @transform_10(%arg0: i32) -> (i32, i32) {
    %c0_i32 = arith.constant 0 : i32
    %c0_i32_0 = arith.constant 0 : i32
    return %arg0, %c0_i32 : i32, i32
  }
  func.func @transform_11(%arg0: i32) -> (i32, i32) {
    %c0_i32 = arith.constant 0 : i32
    %c0_i32_0 = arith.constant 0 : i32
    return %arg0, %c0_i32 : i32, i32
  }
  func.func @transform_12(%arg0: i32) -> (i32, i32) {
    %c0_i32 = arith.constant 0 : i32
    %c0_i32_0 = arith.constant 0 : i32
    return %arg0, %c0_i32 : i32, i32
  }
}

</mosaic_0001>

<llo_original>
// kernel: tpu_custom_call.1
$region0: #{tpu_custom_call.1}
  #allocation0 [shape = 'u32[]', space=smem, size = 0x4, offset = 0x4, fixed_abs, tag = 'smem constant byte address 0x4 - core index']
  #allocation1 [shape = 'u32[144,128]{1,0:T(1,128)}', space=vmem, size = 0x12000, scoped, tag = 'internal scratch']
  %s0 = inlined_call_operand.hbm [shape: f32[128,17], index: 0, kind: input, shape index: {}]
  %s1 = inlined_call_operand.hbm [shape: f32[1,128], index: 1, kind: input, shape index: {}]
  %s2 = inlined_call_operand.hbm [shape: f32[128,1], index: 2, kind: input, shape index: {}]
  %s3 = inlined_call_operand.hbm [shape: bf16[128,128], index: 3, kind: input, shape index: {}]
  %s4 = inlined_call_operand.hbm [shape: bf16[128,128], index: 4, kind: input, shape index: {}]
  %s5 = inlined_call_operand.hbm [shape: f32[16,8], index: 5, kind: input, shape index: {}]
  %s6 = inlined_call_operand.hbm [shape: f32[8,16], index: 6, kind: input, shape index: {}]
  %s7 = inlined_call_operand.hbm [shape: f32[1,16], index: 7, kind: input, shape index: {}]
  %s8 = inlined_call_operand.hbm [shape: f32[16,32], index: 8, kind: input, shape index: {}]
  %s9 = inlined_call_operand.hbm [shape: f32[1,32], index: 9, kind: input, shape index: {}]
  %s10 = inlined_call_operand.hbm [shape: f32[128,8], index: 10, kind: output, shape index: {0}]
  %s11 = inlined_call_operand.hbm [shape: f32[128,8], index: 11, kind: output, shape index: {1}]
  %s12 = inlined_call_operand.hbm [shape: f32[128,32], index: 12, kind: output, shape index: {2}]
  %13 = xla_tuple %s10, %s11, %s12
  %s14 = sld [smem:[#allocation0]]
  $region106: #{tpu_custom_call.1} parent=0
    _
  %s16 = ssub.s32 1, %s14
  %s17 = scalar_select 0, %s16, %s14
  $region1: #{tpu_custom_call.1} parent=0
    #allocation2 [shape = 'u8[65536]{0}', space=vmem, size = 0x10000, scoped, tag = 'input window, operand 0, single buffered']
    #allocation3 [shape = 's32[1]{0}', space=sflag, size = 0x4, scoped, tag = 'scoped memory for tpu_custom_call.1']
    #allocation4 [shape = 's32[1]{0}', space=sflag, size = 0x4, scoped, tag = 'scoped memory for tpu_custom_call.1']
    #allocation5 [shape = 'u8[512]{0}', space=vmem, size = 0x400, scoped, tag = 'input window, operand 1, single buffered']
    #allocation6 [shape = 's32[1]{0}', space=sflag, size = 0x4, scoped, tag = 'scoped memory for tpu_custom_call.1']
    #allocation7 [shape = 'u8[65536]{0}', space=vmem, size = 0x10000, scoped, tag = 'input window, operand 2, single buffered']
    #allocation8 [shape = 'u8[32768]{0}', space=vmem, size = 0x8000, scoped, tag = 'input window, operand 3, single buffered']
    #allocation9 [shape = 's32[1]{0}', space=sflag, size = 0x4, scoped, tag = 'scoped memory for tpu_custom_call.1']
    #allocation10 [shape = 'u8[32768]{0}', space=vmem, size = 0x8000, scoped, tag = 'input window, operand 4, single buffered']
    #allocation11 [shape = 'u8[8192]{0}', space=vmem, size = 0x2000, scoped, tag = 'input window, operand 5, single buffered']
    #allocation12 [shape = 's32[1]{0}', space=sflag, size = 0x4, scoped, tag = 'scoped memory for tpu_custom_call.1']
    #allocation13 [shape = 'u8[4096]{0}', space=vmem, size = 0x1000, scoped, tag = 'input window, operand 6, single buffered']
    #allocation14 [shape = 'u8[512]{0}', space=vmem, size = 0x400, scoped, tag = 'input window, operand 7, single buffered']
    #allocation15 [shape = 's32[1]{0}', space=sflag, size = 0x4, scoped, tag = 'scoped memory for tpu_custom_call.1']
    #allocation16 [shape = 'u8[8192]{0}', space=vmem, size = 0x2000, scoped, tag = 'input window, operand 8, single buffered']
    #allocation17 [shape = 'u8[512]{0}', space=vmem, size = 0x400, scoped, tag = 'input window, operand 9, single buffered']
    #allocation18 [shape = 's32[1]{0}', space=sflag, size = 0x4, scoped, tag = 'scoped memory for tpu_custom_call.1']
    #allocation19 [shape = 'u8[65536]{0}', space=vmem, size = 0x10000, scoped, tag = 'output window, operand 0, single buffered']
    #allocation20 [shape = 'u8[65536]{0}', space=vmem, size = 0x10000, scoped, tag = 'output window, operand 1, single buffered']
    #allocation21 [shape = 's32[1]{0}', space=sflag, size = 0x4, scoped, tag = 'scoped memory for tpu_custom_call.1']
    #allocation22 [shape = 'u8[65536]{0}', space=vmem, size = 0x10000, scoped, tag = 'output window, operand 2, single buffered']
    %18 = vsyncpa [#allocation3], 0
    %19 = vsyncpa [#allocation6], 0
    %20 = vsyncpa [#allocation9], 0
    %21 = vsyncpa [#allocation12], 0
    %22 = vsyncpa [#allocation15], 0
    %23 = vsyncpa [#allocation18], 0
    %24 = vsyncpa [#allocation4], 0
    %25 = vsyncpa [#allocation21], 0
    // Predicated region
    $region2: #{tpu_custom_call.1} parent=1 // pred_check
      _
    $region3: #{tpu_custom_call.1} parent=1 // pred_check_branch
      %27 = sbr.rel (0) target = $region5
    $region4: #{tpu_custom_call.1} parent=1 // pred_region
      %s29 = ssub.s32 2048, 2048
      %30 = vsyncadd [#allocation3], %s29
      %s31 = sshll.u32 [#allocation2], 4
      %s32 = int_to_ptr.vmem [resolvable:$true] %s31
      %37 = dma.hbm_to_vmem [thread:$0]  %s0, 2048, %s32, [#allocation3], 128, 128, 8
    $region5: #{tpu_custom_call.1} parent=1 // pred_fallthru
      _
    // Predicated region
    $region6: #{tpu_custom_call.1} parent=1 // pred_check
      _
    $region7: #{tpu_custom_call.1} parent=1 // pred_check_branch
      %39 = sbr.rel (0) target = $region9
    $region8: #{tpu_custom_call.1} parent=1 // pred_region
      %s41 = ssub.s32 16, 16
      %42 = vsyncadd [#allocation6], %s41
      %s44 = sshll.u32 [#allocation5], 4
      %s45 = int_to_ptr.vmem [resolvable:$true] %s44
      %47 = dma.hbm_to_vmem [thread:$0]  %s1, 16, %s45, [#allocation6]
    $region9: #{tpu_custom_call.1} parent=1 // pred_fallthru
      _
    // Predicated region
    $region10: #{tpu_custom_call.1} parent=1 // pred_check
      _
    $region11: #{tpu_custom_call.1} parent=1 // pred_check_branch
      %49 = sbr.rel (0) target = $region13
    $region12: #{tpu_custom_call.1} parent=1 // pred_region
      %s51 = ssub.s32 2048, 2048
      %52 = vsyncadd [#allocation6], %s51
      %s53 = sshll.u32 [#allocation7], 4
      %s54 = int_to_ptr.vmem [resolvable:$true] %s53
      %59 = dma.hbm_to_vmem [thread:$0]  %s2, 2048, %s54, [#allocation6], 128, 128, 8
    $region13: #{tpu_custom_call.1} parent=1 // pred_fallthru
      _
    // Predicated region
    $region14: #{tpu_custom_call.1} parent=1 // pred_check
      _
    $region15: #{tpu_custom_call.1} parent=1 // pred_check_branch
      %61 = sbr.rel (0) target = $region17
    $region16: #{tpu_custom_call.1} parent=1 // pred_region
      %s63 = ssub.s32 1024, 1024
      %64 = vsyncadd [#allocation9], %s63
      %s65 = sshll.u32 [#allocation8], 4
      %s66 = int_to_ptr.vmem [resolvable:$true] %s65
      %71 = dma.hbm_to_vmem [thread:$0]  %s3, 1024, %s66, [#allocation9], 64, 64, 4
    $region17: #{tpu_custom_call.1} parent=1 // pred_fallthru
      _
    // Predicated region
    $region18: #{tpu_custom_call.1} parent=1 // pred_check
      _
    $region19: #{tpu_custom_call.1} parent=1 // pred_check_branch
      %73 = sbr.rel (0) target = $region21
    $region20: #{tpu_custom_call.1} parent=1 // pred_region
      %s75 = ssub.s32 1024, 1024
      %76 = vsyncadd [#allocation9], %s75
      %s77 = sshll.u32 [#allocation10], 4
      %s78 = int_to_ptr.vmem [resolvable:$true] %s77
      %83 = dma.hbm_to_vmem [thread:$0]  %s4, 1024, %s78, [#allocation9], 64, 64, 4
    $region21: #{tpu_custom_call.1} parent=1 // pred_fallthru
      _
    // Predicated region
    $region22: #{tpu_custom_call.1} parent=1 // pred_check
      _
    $region23: #{tpu_custom_call.1} parent=1 // pred_check_branch
      %85 = sbr.rel (0) target = $region25
    $region24: #{tpu_custom_call.1} parent=1 // pred_region
      %s87 = ssub.s32 256, 256
      %88 = vsyncadd [#allocation12], %s87
      %s89 = sshll.u32 [#allocation11], 4
      %s90 = int_to_ptr.vmem [resolvable:$true] %s89
      %95 = dma.hbm_to_vmem [thread:$0]  %s5, 256, %s90, [#allocation12], 128, 128, 8
    $region25: #{tpu_custom_call.1} parent=1 // pred_fallthru
      _
    // Predicated region
    $region26: #{tpu_custom_call.1} parent=1 // pred_check
      _
    $region27: #{tpu_custom_call.1} parent=1 // pred_check_branch
      %97 = sbr.rel (0) target = $region29
    $region28: #{tpu_custom_call.1} parent=1 // pred_region
      %s99 = ssub.s32 128, 128
      %100 = vsyncadd [#allocation12], %s99
      %s102 = sshll.u32 [#allocation13], 4
      %s103 = int_to_ptr.vmem [resolvable:$true] %s102
      %105 = dma.hbm_to_vmem [thread:$0]  %s6, 128, %s103, [#allocation12]
    $region29: #{tpu_custom_call.1} parent=1 // pred_fallthru
      _
    // Predicated region
    $region30: #{tpu_custom_call.1} parent=1 // pred_check
      _
    $region31: #{tpu_custom_call.1} parent=1 // pred_check_branch
      %107 = sbr.rel (0) target = $region33
    $region32: #{tpu_custom_call.1} parent=1 // pred_region
      %s109 = ssub.s32 16, 16
      %110 = vsyncadd [#allocation15], %s109
      %s112 = sshll.u32 [#allocation14], 4
      %s113 = int_to_ptr.vmem [resolvable:$true] %s112
      %115 = dma.hbm_to_vmem [thread:$0]  %s7, 16, %s113, [#allocation15]
    $region33: #{tpu_custom_call.1} parent=1 // pred_fallthru
      _
    // Predicated region
    $region34: #{tpu_custom_call.1} parent=1 // pred_check
      _
    $region35: #{tpu_custom_call.1} parent=1 // pred_check_branch
      %117 = sbr.rel (0) target = $region37
    $region36: #{tpu_custom_call.1} parent=1 // pred_region
      %s119 = ssub.s32 256, 256
      %120 = vsyncadd [#allocation15], %s119
      %s121 = sshll.u32 [#allocation16], 4
      %s122 = int_to_ptr.vmem [resolvable:$true] %s121
      %127 = dma.hbm_to_vmem [thread:$0]  %s8, 256, %s122, [#allocation15], 128, 128, 8
    $region37: #{tpu_custom_call.1} parent=1 // pred_fallthru
      _
    // Predicated region
    $region38: #{tpu_custom_call.1} parent=1 // pred_check
      _
    $region39: #{tpu_custom_call.1} parent=1 // pred_check_branch
      %129 = sbr.rel (0) target = $region41
    $region40: #{tpu_custom_call.1} parent=1 // pred_region
      %s131 = ssub.s32 16, 16
      %132 = vsyncadd [#allocation18], %s131
      %s134 = sshll.u32 [#allocation17], 4
      %s135 = int_to_ptr.vmem [resolvable:$true] %s134
      %137 = dma.hbm_to_vmem [thread:$0]  %s9, 16, %s135, [#allocation18]
    $region41: #{tpu_custom_call.1} parent=1 // pred_fallthru
      _
    // Predicated region
    $region42: #{tpu_custom_call.1} parent=1 // pred_check
      _
    $region43: #{tpu_custom_call.1} parent=1 // pred_check_branch
      %139 = sbr.rel (0) target = $region45
    $region44: #{tpu_custom_call.1} parent=1 // pred_region
      %140 = dma.done [#allocation3], 2048
    $region45: #{tpu_custom_call.1} parent=1 // pred_fallthru
      _
    // Predicated region
    $region46: #{tpu_custom_call.1} parent=1 // pred_check
      _
    $region47: #{tpu_custom_call.1} parent=1 // pred_check_branch
      %142 = sbr.rel (0) target = $region49
    $region48: #{tpu_custom_call.1} parent=1 // pred_region
      %143 = dma.done [#allocation6], 16
    $region49: #{tpu_custom_call.1} parent=1 // pred_fallthru
      _
    // Predicated region
    $region50: #{tpu_custom_call.1} parent=1 // pred_check
      _
    $region51: #{tpu_custom_call.1} parent=1 // pred_check_branch
      %145 = sbr.rel (0) target = $region53
    $region52: #{tpu_custom_call.1} parent=1 // pred_region
      %146 = dma.done [#allocation6], 2048
    $region53: #{tpu_custom_call.1} parent=1 // pred_fallthru
      _
    // Predicated region
    $region54: #{tpu_custom_call.1} parent=1 // pred_check
      _
    $region55: #{tpu_custom_call.1} parent=1 // pred_check_branch
      %148 = sbr.rel (0) target = $region57
    $region56: #{tpu_custom_call.1} parent=1 // pred_region
      %149 = dma.done [#allocation9], 1024
    $region57: #{tpu_custom_call.1} parent=1 // pred_fallthru
      _
    // Predicated region
    $region58: #{tpu_custom_call.1} parent=1 // pred_check
      _
    $region59: #{tpu_custom_call.1} parent=1 // pred_check_branch
      %151 = sbr.rel (0) target = $region61
    $region60: #{tpu_custom_call.1} parent=1 // pred_region
      %152 = dma.done [#allocation9], 1024
    $region61: #{tpu_custom_call.1} parent=1 // pred_fallthru
      _
    // Predicated region
    $region62: #{tpu_custom_call.1} parent=1 // pred_check
      _
    $region63: #{tpu_custom_call.1} parent=1 // pred_check_branch
      %154 = sbr.rel (0) target = $region65
    $region64: #{tpu_custom_call.1} parent=1 // pred_region
      %155 = dma.done [#allocation12], 256
    $region65: #{tpu_custom_call.1} parent=1 // pred_fallthru
      _
    // Predicated region
    $region66: #{tpu_custom_call.1} parent=1 // pred_check
      _
    $region67: #{tpu_custom_call.1} parent=1 // pred_check_branch
      %157 = sbr.rel (0) target = $region69
    $region68: #{tpu_custom_call.1} parent=1 // pred_region
      %158 = dma.done [#allocation12], 128
    $region69: #{tpu_custom_call.1} parent=1 // pred_fallthru
      _
    // Predicated region
    $region70: #{tpu_custom_call.1} parent=1 // pred_check
      _
    $region71: #{tpu_custom_call.1} parent=1 // pred_check_branch
      %160 = sbr.rel (0) target = $region73
    $region72: #{tpu_custom_call.1} parent=1 // pred_region
      %161 = dma.done [#allocation15], 16
    $region73: #{tpu_custom_call.1} parent=1 // pred_fallthru
      _
    // Predicated region
    $region74: #{tpu_custom_call.1} parent=1 // pred_check
      _
    $region75: #{tpu_custom_call.1} parent=1 // pred_check_branch
      %163 = sbr.rel (0) target = $region77
    $region76: #{tpu_custom_call.1} parent=1 // pred_region
      %164 = dma.done [#allocation15], 256
    $region77: #{tpu_custom_call.1} parent=1 // pred_fallthru
      _
    // Predicated region
    $region78: #{tpu_custom_call.1} parent=1 // pred_check
      _
    $region79: #{tpu_custom_call.1} parent=1 // pred_check_branch
      %166 = sbr.rel (0) target = $region81
    $region80: #{tpu_custom_call.1} parent=1 // pred_region
      %167 = dma.done [#allocation18], 16
    $region81: #{tpu_custom_call.1} parent=1 // pred_fallthru
      _
    %v168 = vld [vmem:[#allocation2] sm:$0xff]
    %v169 = vld [vmem:[#allocation2 + $0x8] sm:$0xff]
    %v170 = vld [vmem:[#allocation2 + $0x10] sm:$0xff]
    %v171 = vld [vmem:[#allocation2 + $0x18] sm:$0xff]
    %v172 = vld [vmem:[#allocation2 + $0x20] sm:$0xff]
    %v173 = vld [vmem:[#allocation2 + $0x28] sm:$0xff]
    %v174 = vld [vmem:[#allocation2 + $0x30] sm:$0xff]
    %v175 = vld [vmem:[#allocation2 + $0x38] sm:$0xff]
    %v176 = vld [vmem:[#allocation2 + $0x40] sm:$0xff]
    %v177 = vld [vmem:[#allocation2 + $0x48] sm:$0xff]
    %v178 = vld [vmem:[#allocation2 + $0x50] sm:$0xff]
    %v179 = vld [vmem:[#allocation2 + $0x58] sm:$0xff]
    %v180 = vld [vmem:[#allocation2 + $0x60] sm:$0xff]
    %v181 = vld [vmem:[#allocation2 + $0x68] sm:$0xff]
    %v182 = vld [vmem:[#allocation2 + $0x70] sm:$0xff]
    %v183 = vld [vmem:[#allocation2 + $0x78] sm:$0xff]
    %v184 = vld [vmem:[#allocation5] sm:$0x1]
    %v185 = vld [vmem:[#allocation7] sm:$0xff]
    %v186 = vld [vmem:[#allocation7 + $0x8] sm:$0xff]
    %v187 = vld [vmem:[#allocation7 + $0x10] sm:$0xff]
    %v188 = vld [vmem:[#allocation7 + $0x18] sm:$0xff]
    %v189 = vld [vmem:[#allocation7 + $0x20] sm:$0xff]
    %v190 = vld [vmem:[#allocation7 + $0x28] sm:$0xff]
    %v191 = vld [vmem:[#allocation7 + $0x30] sm:$0xff]
    %v192 = vld [vmem:[#allocation7 + $0x38] sm:$0xff]
    %v193 = vld [vmem:[#allocation7 + $0x40] sm:$0xff]
    %v194 = vld [vmem:[#allocation7 + $0x48] sm:$0xff]
    %v195 = vld [vmem:[#allocation7 + $0x50] sm:$0xff]
    %v196 = vld [vmem:[#allocation7 + $0x58] sm:$0xff]
    %v197 = vld [vmem:[#allocation7 + $0x60] sm:$0xff]
    %v198 = vld [vmem:[#allocation7 + $0x68] sm:$0xff]
    %v199 = vld [vmem:[#allocation7 + $0x70] sm:$0xff]
    %v200 = vld [vmem:[#allocation7 + $0x78] sm:$0xff]
    %202 = vset.pattern.permute.xlu0 0
    %203 = vperm.xlu0 %202, %v185
    %v204 = vpop.permute.xlu0 %203
    %207 = vset.pattern.permute.xlu0 0
    %208 = vperm.xlu0 %207, %v186
    %v209 = vpop.permute.xlu0 %208
    %212 = vset.pattern.permute.xlu0 0
    %213 = vperm.xlu0 %212, %v187
    %v214 = vpop.permute.xlu0 %213
    %217 = vset.pattern.permute.xlu0 0
    %218 = vperm.xlu0 %217, %v188
    %v219 = vpop.permute.xlu0 %218
    %222 = vset.pattern.permute.xlu0 0
    %223 = vperm.xlu0 %222, %v189
    %v224 = vpop.permute.xlu0 %223
    %227 = vset.pattern.permute.xlu0 0
    %228 = vperm.xlu0 %227, %v190
    %v229 = vpop.permute.xlu0 %228
    %232 = vset.pattern.permute.xlu0 0
    %233 = vperm.xlu0 %232, %v191
    %v234 = vpop.permute.xlu0 %233
    %237 = vset.pattern.permute.xlu0 0
    %238 = vperm.xlu0 %237, %v192
    %v239 = vpop.permute.xlu0 %238
    %242 = vset.pattern.permute.xlu0 0
    %243 = vperm.xlu0 %242, %v193
    %v244 = vpop.permute.xlu0 %243
    %247 = vset.pattern.permute.xlu0 0
    %248 = vperm.xlu0 %247, %v194
    %v249 = vpop.permute.xlu0 %248
    %252 = vset.pattern.permute.xlu0 0
    %253 = vperm.xlu0 %252, %v195
    %v254 = vpop.permute.xlu0 %253
    %257 = vset.pattern.permute.xlu0 0
    %258 = vperm.xlu0 %257, %v196
    %v259 = vpop.permute.xlu0 %258
    %262 = vset.pattern.permute.xlu0 0
    %263 = vperm.xlu0 %262, %v197
    %v264 = vpop.permute.xlu0 %263
    %267 = vset.pattern.permute.xlu0 0
    %268 = vperm.xlu0 %267, %v198
    %v269 = vpop.permute.xlu0 %268
    %272 = vset.pattern.permute.xlu0 0
    %273 = vperm.xlu0 %272, %v199
    %v274 = vpop.permute.xlu0 %273
    %277 = vset.pattern.permute.xlu0 0
    %278 = vperm.xlu0 %277, %v200
    %v279 = vpop.permute.xlu0 %278
    %v282 = vlaneseq
    %v283 = vshrl.u32 %v282, 7
    %v284 = vsub.s32 0, %v283
    %v285 = vrot.slane %v184, %v284
    %v287 = vadd.f32 %v204, %v285
    %v288 = vadd.f32 %v209, %v285
    %v289 = vadd.f32 %v214, %v285
    %v290 = vadd.f32 %v219, %v285
    %v291 = vadd.f32 %v224, %v285
    %v292 = vadd.f32 %v229, %v285
    %v293 = vadd.f32 %v234, %v285
    %v294 = vadd.f32 %v239, %v285
    %v295 = vadd.f32 %v244, %v285
    %v296 = vadd.f32 %v249, %v285
    %v297 = vadd.f32 %v254, %v285
    %v298 = vadd.f32 %v259, %v285
    %v299 = vadd.f32 %v264, %v285
    %v300 = vadd.f32 %v269, %v285
    %v301 = vadd.f32 %v274, %v285
    %v302 = vadd.f32 %v279, %v285
    %v303 = vmul.f32 %v287, 0.5
    %v304 = vmul.f32 %v288, 0.5
    %v305 = vmul.f32 %v289, 0.5
    %v306 = vmul.f32 %v290, 0.5
    %v307 = vmul.f32 %v291, 0.5
    %v308 = vmul.f32 %v292, 0.5
    %v309 = vmul.f32 %v293, 0.5
    %v310 = vmul.f32 %v294, 0.5
    %v311 = vmul.f32 %v295, 0.5
    %v312 = vmul.f32 %v296, 0.5
    %v313 = vmul.f32 %v297, 0.5
    %v314 = vmul.f32 %v298, 0.5
    %v315 = vmul.f32 %v299, 0.5
    %v316 = vmul.f32 %v300, 0.5
    %v317 = vmul.f32 %v301, 0.5
    %v318 = vmul.f32 %v302, 0.5
    %v319 = vtanh.pop %v303
    %v320 = vtanh.pop %v304
    %v321 = vtanh.pop %v305
    %v322 = vtanh.pop %v306
    %v323 = vtanh.pop %v307
    %v324 = vtanh.pop %v308
    %v325 = vtanh.pop %v309
    %v326 = vtanh.pop %v310
    %v327 = vtanh.pop %v311
    %v328 = vtanh.pop %v312
    %v329 = vtanh.pop %v313
    %v330 = vtanh.pop %v314
    %v331 = vtanh.pop %v315
    %v332 = vtanh.pop %v316
    %v333 = vtanh.pop %v317
    %v334 = vtanh.pop %v318
    %v335 = vmul.f32 %v319, 0.5
    %v336 = vmul.f32 %v320, 0.5
    %v337 = vmul.f32 %v321, 0.5
    %v338 = vmul.f32 %v322, 0.5
    %v339 = vmul.f32 %v323, 0.5
    %v340 = vmul.f32 %v324, 0.5
    %v341 = vmul.f32 %v325, 0.5
    %v342 = vmul.f32 %v326, 0.5
    %v343 = vmul.f32 %v327, 0.5
    %v344 = vmul.f32 %v328, 0.5
    %v345 = vmul.f32 %v329, 0.5
    %v346 = vmul.f32 %v330, 0.5
    %v347 = vmul.f32 %v331, 0.5
    %v348 = vmul.f32 %v332, 0.5
    %v349 = vmul.f32 %v333, 0.5
    %v350 = vmul.f32 %v334, 0.5
    %v351 = vadd.f32 %v335, 0.5
    %v352 = vadd.f32 %v336, 0.5
    %v353 = vadd.f32 %v337, 0.5
    %v354 = vadd.f32 %v338, 0.5
    %v355 = vadd.f32 %v339, 0.5
    %v356 = vadd.f32 %v340, 0.5
    %v357 = vadd.f32 %v341, 0.5
    %v358 = vadd.f32 %v342, 0.5
    %v359 = vadd.f32 %v343, 0.5
    %v360 = vadd.f32 %v344, 0.5
    %v361 = vadd.f32 %v345, 0.5
    %v362 = vadd.f32 %v346, 0.5
    %v363 = vadd.f32 %v347, 0.5
    %v364 = vadd.f32 %v348, 0.5
    %v365 = vadd.f32 %v349, 0.5
    %v366 = vadd.f32 %v350, 0.5
    %v367 = vmul.f32 %v351, 1.442695
    %v368 = vpow.pop %v367
    %v369 = vmul.f32 %v352, 1.442695
    %v370 = vpow.pop %v369
    %v371 = vmul.f32 %v353, 1.442695
    %v372 = vpow.pop %v371
    %v373 = vmul.f32 %v354, 1.442695
    %v374 = vpow.pop %v373
    %v375 = vmul.f32 %v355, 1.442695
    %v376 = vpow.pop %v375
    %v377 = vmul.f32 %v356, 1.442695
    %v378 = vpow.pop %v377
    %v379 = vmul.f32 %v357, 1.442695
    %v380 = vpow.pop %v379
    %v381 = vmul.f32 %v358, 1.442695
    %v382 = vpow.pop %v381
    %v383 = vmul.f32 %v359, 1.442695
    %v384 = vpow.pop %v383
    %v385 = vmul.f32 %v360, 1.442695
    %v386 = vpow.pop %v385
    %v387 = vmul.f32 %v361, 1.442695
    %v388 = vpow.pop %v387
    %v389 = vmul.f32 %v362, 1.442695
    %v390 = vpow.pop %v389
    %v391 = vmul.f32 %v363, 1.442695
    %v392 = vpow.pop %v391
    %v393 = vmul.f32 %v364, 1.442695
    %v394 = vpow.pop %v393
    %v395 = vmul.f32 %v365, 1.442695
    %v396 = vpow.pop %v395
    %v397 = vmul.f32 %v366, 1.442695
    %v398 = vpow.pop %v397
    %v399 = vld [vmem:[#allocation8] sm:$0xf]
    %v400 = vld [vmem:[#allocation8 + $0x4] sm:$0xf]
    %v401 = vld [vmem:[#allocation8 + $0x8] sm:$0xf]
    %v402 = vld [vmem:[#allocation8 + $0xc] sm:$0xf]
    %v403 = vld [vmem:[#allocation8 + $0x10] sm:$0xf]
    %v404 = vld [vmem:[#allocation8 + $0x14] sm:$0xf]
    %v405 = vld [vmem:[#allocation8 + $0x18] sm:$0xf]
    %v406 = vld [vmem:[#allocation8 + $0x1c] sm:$0xf]
    %v407 = vld [vmem:[#allocation8 + $0x20] sm:$0xf]
    %v408 = vld [vmem:[#allocation8 + $0x24] sm:$0xf]
    %v409 = vld [vmem:[#allocation8 + $0x28] sm:$0xf]
    %v410 = vld [vmem:[#allocation8 + $0x2c] sm:$0xf]
    %v411 = vld [vmem:[#allocation8 + $0x30] sm:$0xf]
    %v412 = vld [vmem:[#allocation8 + $0x34] sm:$0xf]
    %v413 = vld [vmem:[#allocation8 + $0x38] sm:$0xf]
    %v414 = vld [vmem:[#allocation8 + $0x3c] sm:$0xf]
    %v415 = vunpack.c.l.bf16 %v399
    %v416 = vunpack.c.l.bf16 %v400
    %v417 = vunpack.c.l.bf16 %v401
    %v418 = vunpack.c.l.bf16 %v402
    %v419 = vunpack.c.l.bf16 %v403
    %v420 = vunpack.c.l.bf16 %v404
    %v421 = vunpack.c.l.bf16 %v405
    %v422 = vunpack.c.l.bf16 %v406
    %v423 = vunpack.c.l.bf16 %v407
    %v424 = vunpack.c.l.bf16 %v408
    %v425 = vunpack.c.l.bf16 %v409
    %v426 = vunpack.c.l.bf16 %v410
    %v427 = vunpack.c.l.bf16 %v411
    %v428 = vunpack.c.l.bf16 %v412
    %v429 = vunpack.c.l.bf16 %v413
    %v430 = vunpack.c.l.bf16 %v414
    %v431 = vmul.f32 %v415, %v368
    %v432 = vmul.f32 %v416, %v370
    %v433 = vmul.f32 %v417, %v372
    %v434 = vmul.f32 %v418, %v374
    %v435 = vmul.f32 %v419, %v376
    %v436 = vmul.f32 %v420, %v378
    %v437 = vmul.f32 %v421, %v380
    %v438 = vmul.f32 %v422, %v382
    %v439 = vmul.f32 %v423, %v384
    %v440 = vmul.f32 %v424, %v386
    %v441 = vmul.f32 %v425, %v388
    %v442 = vmul.f32 %v426, %v390
    %v443 = vmul.f32 %v427, %v392
    %v444 = vmul.f32 %v428, %v394
    %v445 = vmul.f32 %v429, %v396
    %v446 = vmul.f32 %v430, %v398
    %447 = vmatprep.subr.mxu0 0.0
    %448 = vmatpush1.msra.mxu0 %v168
    %449 = vmatprep.subr.mxu0 0.0
    %450 = vmatpush1.msra.mxu0 %v169
    %451 = vmatprep.subr.mxu0 0.0
    %452 = vmatpush1.msra.mxu0 %v170
    %453 = vmatprep.subr.mxu0 0.0
    %454 = vmatpush1.msra.mxu0 %v171
    %455 = vmatprep.subr.mxu0 0.0
    %456 = vmatpush1.msra.mxu0 %v172
    %457 = vmatprep.subr.mxu0 0.0
    %458 = vmatpush1.msra.mxu0 %v173
    %459 = vmatprep.subr.mxu0 0.0
    %460 = vmatpush1.msra.mxu0 %v174
    %461 = vmatprep.subr.mxu0 0.0
    %462 = vmatpush1.msra.mxu0 %v175
    %463 = vmatprep.subr.mxu0 0.0
    %464 = vmatpush1.msra.mxu0 %v176
    %465 = vmatprep.subr.mxu0 0.0
    %466 = vmatpush1.msra.mxu0 %v177
    %467 = vmatprep.subr.mxu0 0.0
    %468 = vmatpush1.msra.mxu0 %v178
    %469 = vmatprep.subr.mxu0 0.0
    %470 = vmatpush1.msra.mxu0 %v179
    %471 = vmatprep.subr.mxu0 0.0
    %472 = vmatpush1.msra.mxu0 %v180
    %473 = vmatprep.subr.mxu0 0.0
    %474 = vmatpush1.msra.mxu0 %v181
    %475 = vmatprep.subr.mxu0 0.0
    %476 = vmatpush1.msra.mxu0 %v182
    %477 = vmatprep.subr.mxu0 0.0
    %478 = vmatpush1.msra.mxu0 %v183
    %479 = vmatprep.subr.mxu0 0.0
    %480 = vmatpush1.msra.mxu0 0.0
    %481 = vmatprep.subr.mxu0 0.0
    %482 = vmatpush1.msra.mxu0 0.0
    %483 = vmatprep.subr.mxu0 0.0
    %484 = vmatpush1.msra.mxu0 0.0
    %485 = vmatprep.subr.mxu0 0.0
    %486 = vmatpush1.msra.mxu0 0.0
    %487 = vmatprep.subr.mxu0 0.0
    %488 = vmatpush1.msra.mxu0 0.0
    %489 = vmatprep.subr.mxu0 0.0
    %490 = vmatpush1.msra.mxu0 0.0
    %491 = vmatprep.subr.mxu0 0.0
    %492 = vmatpush1.msra.mxu0 0.0
    %493 = vmatprep.subr.mxu0 0.0
    %494 = vmatpush1.msra.mxu0 0.0
    %495 = vmatprep.subr.mxu0 0.0
    %496 = vmatpush1.msra.mxu0 0.0
    %497 = vmatprep.subr.mxu0 0.0
    %498 = vmatpush1.msra.mxu0 0.0
    %499 = vmatprep.subr.mxu0 0.0
    %500 = vmatpush1.msra.mxu0 0.0
    %501 = vmatprep.subr.mxu0 0.0
    %502 = vmatpush1.msra.mxu0 0.0
    %503 = vmatprep.subr.mxu0 0.0
    %504 = vmatpush1.msra.mxu0 0.0
    %505 = vmatprep.subr.mxu0 0.0
    %506 = vmatpush1.msra.mxu0 0.0
    %507 = vmatprep.subr.mxu0 0.0
    %508 = vmatpush1.msra.mxu0 0.0
    %509 = vmatprep.subr.mxu0 0.0
    %510 = vmatpush1.msra.mxu0 0.0
    %511 = vmatprep.mubr.f32.mxu0 0.0
    %512 = vmatmul.mubr.f32.gmra.mrb[0].mxu0 %v431
    %v513 = vpop.f32.mrb[0].mxu0
    %v514 = vadd.f32 0.0, %v513
    %v515 = vpop.f32.mrb[0].mxu0
    %516 = vmatprep.mubr.f32.mxu0 0.0
    %517 = vmatmul.mubr.f32.gmra.mrb[0].mxu0 %v432
    %v518 = vpop.f32.mrb[0].mxu0
    %v519 = vadd.f32 0.0, %v518
    %v520 = vpop.f32.mrb[0].mxu0
    %521 = vmatprep.mubr.f32.mxu0 0.0
    %522 = vmatmul.mubr.f32.gmra.mrb[0].mxu0 %v433
    %v523 = vpop.f32.mrb[0].mxu0
    %v524 = vadd.f32 0.0, %v523
    %v525 = vpop.f32.mrb[0].mxu0
    %526 = vmatprep.mubr.f32.mxu0 0.0
    %527 = vmatmul.mubr.f32.gmra.mrb[0].mxu0 %v434
    %v528 = vpop.f32.mrb[0].mxu0
    %v529 = vadd.f32 0.0, %v528
    %v530 = vpop.f32.mrb[0].mxu0
    %531 = vmatprep.mubr.f32.mxu0 0.0
    %532 = vmatmul.mubr.f32.gmra.mrb[0].mxu0 %v435
    %v533 = vpop.f32.mrb[0].mxu0
    %v534 = vadd.f32 0.0, %v533
    %v535 = vpop.f32.mrb[0].mxu0
    %536 = vmatprep.mubr.f32.mxu0 0.0
    %537 = vmatmul.mubr.f32.gmra.mrb[0].mxu0 %v436
    %v538 = vpop.f32.mrb[0].mxu0
    %v539 = vadd.f32 0.0, %v538
    %v540 = vpop.f32.mrb[0].mxu0
    %541 = vmatprep.mubr.f32.mxu0 0.0
    %542 = vmatmul.mubr.f32.gmra.mrb[0].mxu0 %v437
    %v543 = vpop.f32.mrb[0].mxu0
    %v544 = vadd.f32 0.0, %v543
    %v545 = vpop.f32.mrb[0].mxu0
    %546 = vmatprep.mubr.f32.mxu0 0.0
    %547 = vmatmul.mubr.f32.gmra.mrb[0].mxu0 %v438
    %v548 = vpop.f32.mrb[0].mxu0
    %v549 = vadd.f32 0.0, %v548
    %v550 = vpop.f32.mrb[0].mxu0
    %551 = vmatprep.mubr.f32.mxu0 0.0
    %552 = vmatmul.mubr.f32.gmra.mrb[0].mxu0 %v439
    %v553 = vpop.f32.mrb[0].mxu0
    %v554 = vadd.f32 0.0, %v553
    %v555 = vpop.f32.mrb[0].mxu0
    %556 = vmatprep.mubr.f32.mxu0 0.0
    %557 = vmatmul.mubr.f32.gmra.mrb[0].mxu0 %v440
    %v558 = vpop.f32.mrb[0].mxu0
    %v559 = vadd.f32 0.0, %v558
    %v560 = vpop.f32.mrb[0].mxu0
    %561 = vmatprep.mubr.f32.mxu0 0.0
    %562 = vmatmul.mubr.f32.gmra.mrb[0].mxu0 %v441
    %v563 = vpop.f32.mrb[0].mxu0
    %v564 = vadd.f32 0.0, %v563
    %v565 = vpop.f32.mrb[0].mxu0
    %566 = vmatprep.mubr.f32.mxu0 0.0
    %567 = vmatmul.mubr.f32.gmra.mrb[0].mxu0 %v442
    %v568 = vpop.f32.mrb[0].mxu0
    %v569 = vadd.f32 0.0, %v568
    %v570 = vpop.f32.mrb[0].mxu0
    %571 = vmatprep.mubr.f32.mxu0 0.0
    %572 = vmatmul.mubr.f32.gmra.mrb[0].mxu0 %v443
    %v573 = vpop.f32.mrb[0].mxu0
    %v574 = vadd.f32 0.0, %v573
    %v575 = vpop.f32.mrb[0].mxu0
    %576 = vmatprep.mubr.f32.mxu0 0.0
    %577 = vmatmul.mubr.f32.gmra.mrb[0].mxu0 %v444
    %v578 = vpop.f32.mrb[0].mxu0
    %v579 = vadd.f32 0.0, %v578
    %v580 = vpop.f32.mrb[0].mxu0
    %581 = vmatprep.mubr.f32.mxu0 0.0
    %582 = vmatmul.mubr.f32.gmra.mrb[0].mxu0 %v445
    %v583 = vpop.f32.mrb[0].mxu0
    %v584 = vadd.f32 0.0, %v583
    %v585 = vpop.f32.mrb[0].mxu0
    %586 = vmatprep.mubr.f32.mxu0 0.0
    %587 = vmatmul.mubr.f32.gmra.mrb[0].mxu0 %v446
    %v588 = vpop.f32.mrb[0].mxu0
    %v589 = vadd.f32 0.0, %v588
    %v590 = vpop.f32.mrb[0].mxu0
    %591 = vdwg.mxu0
    %v592 = vmax.f32 %v514, 1e-06
    %v593 = vmax.f32 %v519, 1e-06
    %v594 = vmax.f32 %v524, 1e-06
    %v595 = vmax.f32 %v529, 1e-06
    %v596 = vmax.f32 %v534, 1e-06
    %v597 = vmax.f32 %v539, 1e-06
    %v598 = vmax.f32 %v544, 1e-06
    %v599 = vmax.f32 %v549, 1e-06
    %v600 = vmax.f32 %v554, 1e-06
    %v601 = vmax.f32 %v559, 1e-06
    %v602 = vmax.f32 %v564, 1e-06
    %v603 = vmax.f32 %v569, 1e-06
    %v604 = vmax.f32 %v574, 1e-06
    %v605 = vmax.f32 %v579, 1e-06
    %v606 = vmax.f32 %v584, 1e-06
    %v607 = vmax.f32 %v589, 1e-06
    %v608 = vrcp.pop %v592
    %v609 = vrcp.pop %v593
    %v610 = vrcp.pop %v594
    %v611 = vrcp.pop %v595
    %v612 = vrcp.pop %v596
    %v613 = vrcp.pop %v597
    %v614 = vrcp.pop %v598
    %v615 = vrcp.pop %v599
    %v616 = vrcp.pop %v600
    %v617 = vrcp.pop %v601
    %v618 = vrcp.pop %v602
    %v619 = vrcp.pop %v603
    %v620 = vrcp.pop %v604
    %v621 = vrcp.pop %v605
    %v622 = vrcp.pop %v606
    %v623 = vrcp.pop %v607
    %625 = vset.pattern.permute.xlu0 16
    %626 = vperm.xlu0 %625, %v608
    %v627 = vpop.permute.xlu0 %626
    %630 = vset.pattern.permute.xlu0 16
    %631 = vperm.xlu0 %630, %v609
    %v632 = vpop.permute.xlu0 %631
    %635 = vset.pattern.permute.xlu0 16
    %636 = vperm.xlu0 %635, %v610
    %v637 = vpop.permute.xlu0 %636
    %640 = vset.pattern.permute.xlu0 16
    %641 = vperm.xlu0 %640, %v611
    %v642 = vpop.permute.xlu0 %641
    %645 = vset.pattern.permute.xlu0 16
    %646 = vperm.xlu0 %645, %v612
    %v647 = vpop.permute.xlu0 %646
    %650 = vset.pattern.permute.xlu0 16
    %651 = vperm.xlu0 %650, %v613
    %v652 = vpop.permute.xlu0 %651
    %655 = vset.pattern.permute.xlu0 16
    %656 = vperm.xlu0 %655, %v614
    %v657 = vpop.permute.xlu0 %656
    %660 = vset.pattern.permute.xlu0 16
    %661 = vperm.xlu0 %660, %v615
    %v662 = vpop.permute.xlu0 %661
    %665 = vset.pattern.permute.xlu0 16
    %666 = vperm.xlu0 %665, %v616
    %v667 = vpop.permute.xlu0 %666
    %670 = vset.pattern.permute.xlu0 16
    %671 = vperm.xlu0 %670, %v617
    %v672 = vpop.permute.xlu0 %671
    %675 = vset.pattern.permute.xlu0 16
    %676 = vperm.xlu0 %675, %v618
    %v677 = vpop.permute.xlu0 %676
    %680 = vset.pattern.permute.xlu0 16
    %681 = vperm.xlu0 %680, %v619
    %v682 = vpop.permute.xlu0 %681
    %685 = vset.pattern.permute.xlu0 16
    %686 = vperm.xlu0 %685, %v620
    %v687 = vpop.permute.xlu0 %686
    %690 = vset.pattern.permute.xlu0 16
    %691 = vperm.xlu0 %690, %v621
    %v692 = vpop.permute.xlu0 %691
    %695 = vset.pattern.permute.xlu0 16
    %696 = vperm.xlu0 %695, %v622
    %v697 = vpop.permute.xlu0 %696
    %700 = vset.pattern.permute.xlu0 16
    %701 = vperm.xlu0 %700, %v623
    %v702 = vpop.permute.xlu0 %701
    %v704 = vmul.f32 %v514, %v627
    %v705 = vmul.f32 %v519, %v632
    %v706 = vmul.f32 %v524, %v637
    %v707 = vmul.f32 %v529, %v642
    %v708 = vmul.f32 %v534, %v647
    %v709 = vmul.f32 %v539, %v652
    %v710 = vmul.f32 %v544, %v657
    %v711 = vmul.f32 %v549, %v662
    %v712 = vmul.f32 %v554, %v667
    %v713 = vmul.f32 %v559, %v672
    %v714 = vmul.f32 %v564, %v677
    %v715 = vmul.f32 %v569, %v682
    %v716 = vmul.f32 %v574, %v687
    %v717 = vmul.f32 %v579, %v692
    %v718 = vmul.f32 %v584, %v697
    %v719 = vmul.f32 %v589, %v702
    %vm720 = vcmp.gt.f32.partialorder %v704, 0.0
    %vm721 = vcmp.gt.f32.partialorder %v705, 0.0
    %vm722 = vcmp.gt.f32.partialorder %v706, 0.0
    %vm723 = vcmp.gt.f32.partialorder %v707, 0.0
    %vm724 = vcmp.gt.f32.partialorder %v708, 0.0
    %vm725 = vcmp.gt.f32.partialorder %v709, 0.0
    %vm726 = vcmp.gt.f32.partialorder %v710, 0.0
    %vm727 = vcmp.gt.f32.partialorder %v711, 0.0
    %vm728 = vcmp.gt.f32.partialorder %v712, 0.0
    %vm729 = vcmp.gt.f32.partialorder %v713, 0.0
    %vm730 = vcmp.gt.f32.partialorder %v714, 0.0
    %vm731 = vcmp.gt.f32.partialorder %v715, 0.0
    %vm732 = vcmp.gt.f32.partialorder %v716, 0.0
    %vm733 = vcmp.gt.f32.partialorder %v717, 0.0
    %vm734 = vcmp.gt.f32.partialorder %v718, 0.0
    %vm735 = vcmp.gt.f32.partialorder %v719, 0.0
    %v736 = vmin.f32 %v704, 0.0
    %v737 = vmin.f32 %v705, 0.0
    %v738 = vmin.f32 %v706, 0.0
    %v739 = vmin.f32 %v707, 0.0
    %v740 = vmin.f32 %v708, 0.0
    %v741 = vmin.f32 %v709, 0.0
    %v742 = vmin.f32 %v710, 0.0
    %v743 = vmin.f32 %v711, 0.0
    %v744 = vmin.f32 %v712, 0.0
    %v745 = vmin.f32 %v713, 0.0
    %v746 = vmin.f32 %v714, 0.0
    %v747 = vmin.f32 %v715, 0.0
    %v748 = vmin.f32 %v716, 0.0
    %v749 = vmin.f32 %v717, 0.0
    %v750 = vmin.f32 %v718, 0.0
    %v751 = vmin.f32 %v719, 0.0
    %v752 = vmul.f32 %v736, 1.442695
    %v753 = vpow.pop %v752
    %v754 = vmul.f32 %v737, 1.442695
    %v755 = vpow.pop %v754
    %v756 = vmul.f32 %v738, 1.442695
    %v757 = vpow.pop %v756
    %v758 = vmul.f32 %v739, 1.442695
    %v759 = vpow.pop %v758
    %v760 = vmul.f32 %v740, 1.442695
    %v761 = vpow.pop %v760
    %v762 = vmul.f32 %v741, 1.442695
    %v763 = vpow.pop %v762
    %v764 = vmul.f32 %v742, 1.442695
    %v765 = vpow.pop %v764
    %v766 = vmul.f32 %v743, 1.442695
    %v767 = vpow.pop %v766
    %v768 = vmul.f32 %v744, 1.442695
    %v769 = vpow.pop %v768
    %v770 = vmul.f32 %v745, 1.442695
    %v771 = vpow.pop %v770
    %v772 = vmul.f32 %v746, 1.442695
    %v773 = vpow.pop %v772
    %v774 = vmul.f32 %v747, 1.442695
    %v775 = vpow.pop %v774
    %v776 = vmul.f32 %v748, 1.442695
    %v777 = vpow.pop %v776
    %v778 = vmul.f32 %v749, 1.442695
    %v779 = vpow.pop %v778
    %v780 = vmul.f32 %v750, 1.442695
    %v781 = vpow.pop %v780
    %v782 = vmul.f32 %v751, 1.442695
    %v783 = vpow.pop %v782
    %v784 = vsub.f32 %v753, 1.0
    %v785 = vsub.f32 %v755, 1.0
    %v786 = vsub.f32 %v757, 1.0
    %v787 = vsub.f32 %v759, 1.0
    %v788 = vsub.f32 %v761, 1.0
    %v789 = vsub.f32 %v763, 1.0
    %v790 = vsub.f32 %v765, 1.0
    %v791 = vsub.f32 %v767, 1.0
    %v792 = vsub.f32 %v769, 1.0
    %v793 = vsub.f32 %v771, 1.0
    %v794 = vsub.f32 %v773, 1.0
    %v795 = vsub.f32 %v775, 1.0
    %v796 = vsub.f32 %v777, 1.0
    %v797 = vsub.f32 %v779, 1.0
    %v798 = vsub.f32 %v781, 1.0
    %v799 = vsub.f32 %v783, 1.0
    %v800 = vsel %vm720, %v704, %v784
    %v801 = vsel %vm721, %v705, %v785
    %v802 = vsel %vm722, %v706, %v786
    %v803 = vsel %vm723, %v707, %v787
    %v804 = vsel %vm724, %v708, %v788
    %v805 = vsel %vm725, %v709, %v789
    %v806 = vsel %vm726, %v710, %v790
    %v807 = vsel %vm727, %v711, %v791
    %v808 = vsel %vm728, %v712, %v792
    %v809 = vsel %vm729, %v713, %v793
    %v810 = vsel %vm730, %v714, %v794
    %v811 = vsel %vm731, %v715, %v795
    %v812 = vsel %vm732, %v716, %v796
    %v813 = vsel %vm733, %v717, %v797
    %v814 = vsel %vm734, %v718, %v798
    %v815 = vsel %vm735, %v719, %v799
    %v816 = vld [vmem:[#allocation10] sm:$0xf]
    %v817 = vld [vmem:[#allocation10 + $0x4] sm:$0xf]
    %v818 = vld [vmem:[#allocation10 + $0x8] sm:$0xf]
    %v819 = vld [vmem:[#allocation10 + $0xc] sm:$0xf]
    %v820 = vld [vmem:[#allocation10 + $0x10] sm:$0xf]
    %v821 = vld [vmem:[#allocation10 + $0x14] sm:$0xf]
    %v822 = vld [vmem:[#allocation10 + $0x18] sm:$0xf]
    %v823 = vld [vmem:[#allocation10 + $0x1c] sm:$0xf]
    %v824 = vld [vmem:[#allocation10 + $0x20] sm:$0xf]
    %v825 = vld [vmem:[#allocation10 + $0x24] sm:$0xf]
    %v826 = vld [vmem:[#allocation10 + $0x28] sm:$0xf]
    %v827 = vld [vmem:[#allocation10 + $0x2c] sm:$0xf]
    %v828 = vld [vmem:[#allocation10 + $0x30] sm:$0xf]
    %v829 = vld [vmem:[#allocation10 + $0x34] sm:$0xf]
    %v830 = vld [vmem:[#allocation10 + $0x38] sm:$0xf]
    %v831 = vld [vmem:[#allocation10 + $0x3c] sm:$0xf]
    %v832 = vunpack.c.l.bf16 %v816
    %v833 = vunpack.c.l.bf16 %v817
    %v834 = vunpack.c.l.bf16 %v818
    %v835 = vunpack.c.l.bf16 %v819
    %v836 = vunpack.c.l.bf16 %v820
    %v837 = vunpack.c.l.bf16 %v821
    %v838 = vunpack.c.l.bf16 %v822
    %v839 = vunpack.c.l.bf16 %v823
    %v840 = vunpack.c.l.bf16 %v824
    %v841 = vunpack.c.l.bf16 %v825
    %v842 = vunpack.c.l.bf16 %v826
    %v843 = vunpack.c.l.bf16 %v827
    %v844 = vunpack.c.l.bf16 %v828
    %v845 = vunpack.c.l.bf16 %v829
    %v846 = vunpack.c.l.bf16 %v830
    %v847 = vunpack.c.l.bf16 %v831
    %v848 = vmul.f32 %v832, %v368
    %v849 = vmul.f32 %v833, %v370
    %v850 = vmul.f32 %v834, %v372
    %v851 = vmul.f32 %v835, %v374
    %v852 = vmul.f32 %v836, %v376
    %v853 = vmul.f32 %v837, %v378
    %v854 = vmul.f32 %v838, %v380
    %v855 = vmul.f32 %v839, %v382
    %v856 = vmul.f32 %v840, %v384
    %v857 = vmul.f32 %v841, %v386
    %v858 = vmul.f32 %v842, %v388
    %v859 = vmul.f32 %v843, %v390
    %v860 = vmul.f32 %v844, %v392
    %v861 = vmul.f32 %v845, %v394
    %v862 = vmul.f32 %v846, %v396
    %v863 = vmul.f32 %v847, %v398
    %864 = vmatprep.subr.mxu0 0.0
    %865 = vmatpush1.msra.mxu0 %v168
    %866 = vmatprep.subr.mxu0 0.0
    %867 = vmatpush1.msra.mxu0 %v169
    %868 = vmatprep.subr.mxu0 0.0
    %869 = vmatpush1.msra.mxu0 %v170
    %870 = vmatprep.subr.mxu0 0.0
    %871 = vmatpush1.msra.mxu0 %v171
    %872 = vmatprep.subr.mxu0 0.0
    %873 = vmatpush1.msra.mxu0 %v172
    %874 = vmatprep.subr.mxu0 0.0
    %875 = vmatpush1.msra.mxu0 %v173
    %876 = vmatprep.subr.mxu0 0.0
    %877 = vmatpush1.msra.mxu0 %v174
    %878 = vmatprep.subr.mxu0 0.0
    %879 = vmatpush1.msra.mxu0 %v175
    %880 = vmatprep.subr.mxu0 0.0
    %881 = vmatpush1.msra.mxu0 %v176
    %882 = vmatprep.subr.mxu0 0.0
    %883 = vmatpush1.msra.mxu0 %v177
    %884 = vmatprep.subr.mxu0 0.0
    %885 = vmatpush1.msra.mxu0 %v178
    %886 = vmatprep.subr.mxu0 0.0
    %887 = vmatpush1.msra.mxu0 %v179
    %888 = vmatprep.subr.mxu0 0.0
    %889 = vmatpush1.msra.mxu0 %v180
    %890 = vmatprep.subr.mxu0 0.0
    %891 = vmatpush1.msra.mxu0 %v181
    %892 = vmatprep.subr.mxu0 0.0
    %893 = vmatpush1.msra.mxu0 %v182
    %894 = vmatprep.subr.mxu0 0.0
    %895 = vmatpush1.msra.mxu0 %v183
    %896 = vmatprep.subr.mxu0 0.0
    %897 = vmatpush1.msra.mxu0 0.0
    %898 = vmatprep.subr.mxu0 0.0
    %899 = vmatpush1.msra.mxu0 0.0
    %900 = vmatprep.subr.mxu0 0.0
    %901 = vmatpush1.msra.mxu0 0.0
    %902 = vmatprep.subr.mxu0 0.0
    %903 = vmatpush1.msra.mxu0 0.0
    %904 = vmatprep.subr.mxu0 0.0
    %905 = vmatpush1.msra.mxu0 0.0
    %906 = vmatprep.subr.mxu0 0.0
    %907 = vmatpush1.msra.mxu0 0.0
    %908 = vmatprep.subr.mxu0 0.0
    %909 = vmatpush1.msra.mxu0 0.0
    %910 = vmatprep.subr.mxu0 0.0
    %911 = vmatpush1.msra.mxu0 0.0
    %912 = vmatprep.subr.mxu0 0.0
    %913 = vmatpush1.msra.mxu0 0.0
    %914 = vmatprep.subr.mxu0 0.0
    %915 = vmatpush1.msra.mxu0 0.0
    %916 = vmatprep.subr.mxu0 0.0
    %917 = vmatpush1.msra.mxu0 0.0
    %918 = vmatprep.subr.mxu0 0.0
    %919 = vmatpush1.msra.mxu0 0.0
    %920 = vmatprep.subr.mxu0 0.0
    %921 = vmatpush1.msra.mxu0 0.0
    %922 = vmatprep.subr.mxu0 0.0
    %923 = vmatpush1.msra.mxu0 0.0
    %924 = vmatprep.subr.mxu0 0.0
    %925 = vmatpush1.msra.mxu0 0.0
    %926 = vmatprep.subr.mxu0 0.0
    %927 = vmatpush1.msra.mxu0 0.0
    %928 = vmatprep.mubr.f32.mxu0 0.0
    %929 = vmatmul.mubr.f32.gmra.mrb[0].mxu0 %v848
    %v930 = vpop.f32.mrb[0].mxu0
    %v931 = vadd.f32 0.0, %v930
    %v932 = vpop.f32.mrb[0].mxu0
    %933 = vmatprep.mubr.f32.mxu0 0.0
    %934 = vmatmul.mubr.f32.gmra.mrb[0].mxu0 %v849
    %v935 = vpop.f32.mrb[0].mxu0
    %v936 = vadd.f32 0.0, %v935
    %v937 = vpop.f32.mrb[0].mxu0
    %938 = vmatprep.mubr.f32.mxu0 0.0
    %939 = vmatmul.mubr.f32.gmra.mrb[0].mxu0 %v850
    %v940 = vpop.f32.mrb[0].mxu0
    %v941 = vadd.f32 0.0, %v940
    %v942 = vpop.f32.mrb[0].mxu0
    %943 = vmatprep.mubr.f32.mxu0 0.0
    %944 = vmatmul.mubr.f32.gmra.mrb[0].mxu0 %v851
    %v945 = vpop.f32.mrb[0].mxu0
    %v946 = vadd.f32 0.0, %v945
    %v947 = vpop.f32.mrb[0].mxu0
    %948 = vmatprep.mubr.f32.mxu0 0.0
    %949 = vmatmul.mubr.f32.gmra.mrb[0].mxu0 %v852
    %v950 = vpop.f32.mrb[0].mxu0
    %v951 = vadd.f32 0.0, %v950
    %v952 = vpop.f32.mrb[0].mxu0
    %953 = vmatprep.mubr.f32.mxu0 0.0
    %954 = vmatmul.mubr.f32.gmra.mrb[0].mxu0 %v853
    %v955 = vpop.f32.mrb[0].mxu0
    %v956 = vadd.f32 0.0, %v955
    %v957 = vpop.f32.mrb[0].mxu0
    %958 = vmatprep.mubr.f32.mxu0 0.0
    %959 = vmatmul.mubr.f32.gmra.mrb[0].mxu0 %v854
    %v960 = vpop.f32.mrb[0].mxu0
    %v961 = vadd.f32 0.0, %v960
    %v962 = vpop.f32.mrb[0].mxu0
    %963 = vmatprep.mubr.f32.mxu0 0.0
    %964 = vmatmul.mubr.f32.gmra.mrb[0].mxu0 %v855
    %v965 = vpop.f32.mrb[0].mxu0
    %v966 = vadd.f32 0.0, %v965
    %v967 = vpop.f32.mrb[0].mxu0
    %968 = vmatprep.mubr.f32.mxu0 0.0
    %969 = vmatmul.mubr.f32.gmra.mrb[0].mxu0 %v856
    %v970 = vpop.f32.mrb[0].mxu0
    %v971 = vadd.f32 0.0, %v970
    %v972 = vpop.f32.mrb[0].mxu0
    %973 = vmatprep.mubr.f32.mxu0 0.0
    %974 = vmatmul.mubr.f32.gmra.mrb[0].mxu0 %v857
    %v975 = vpop.f32.mrb[0].mxu0
    %v976 = vadd.f32 0.0, %v975
    %v977 = vpop.f32.mrb[0].mxu0
    %978 = vmatprep.mubr.f32.mxu0 0.0
    %979 = vmatmul.mubr.f32.gmra.mrb[0].mxu0 %v858
    %v980 = vpop.f32.mrb[0].mxu0
    %v981 = vadd.f32 0.0, %v980
    %v982 = vpop.f32.mrb[0].mxu0
    %983 = vmatprep.mubr.f32.mxu0 0.0
    %984 = vmatmul.mubr.f32.gmra.mrb[0].mxu0 %v859
    %v985 = vpop.f32.mrb[0].mxu0
    %v986 = vadd.f32 0.0, %v985
    %v987 = vpop.f32.mrb[0].mxu0
    %988 = vmatprep.mubr.f32.mxu0 0.0
    %989 = vmatmul.mubr.f32.gmra.mrb[0].mxu0 %v860
    %v990 = vpop.f32.mrb[0].mxu0
    %v991 = vadd.f32 0.0, %v990
    %v992 = vpop.f32.mrb[0].mxu0
    %993 = vmatprep.mubr.f32.mxu0 0.0
    %994 = vmatmul.mubr.f32.gmra.mrb[0].mxu0 %v861
    %v995 = vpop.f32.mrb[0].mxu0
    %v996 = vadd.f32 0.0, %v995
    %v997 = vpop.f32.mrb[0].mxu0
    %998 = vmatprep.mubr.f32.mxu0 0.0
    %999 = vmatmul.mubr.f32.gmra.mrb[0].mxu0 %v862
    %v1000 = vpop.f32.mrb[0].mxu0
    %v1001 = vadd.f32 0.0, %v1000
    %v1002 = vpop.f32.mrb[0].mxu0
    %1003 = vmatprep.mubr.f32.mxu0 0.0
    %1004 = vmatmul.mubr.f32.gmra.mrb[0].mxu0 %v863
    %v1005 = vpop.f32.mrb[0].mxu0
    %v1006 = vadd.f32 0.0, %v1005
    %v1007 = vpop.f32.mrb[0].mxu0
    %1008 = vdwg.mxu0
    %v1009 = vmax.f32 %v931, 1e-06
    %v1010 = vmax.f32 %v936, 1e-06
    %v1011 = vmax.f32 %v941, 1e-06
    %v1012 = vmax.f32 %v946, 1e-06
    %v1013 = vmax.f32 %v951, 1e-06
    %v1014 = vmax.f32 %v956, 1e-06
    %v1015 = vmax.f32 %v961, 1e-06
    %v1016 = vmax.f32 %v966, 1e-06
    %v1017 = vmax.f32 %v971, 1e-06
    %v1018 = vmax.f32 %v976, 1e-06
    %v1019 = vmax.f32 %v981, 1e-06
    %v1020 = vmax.f32 %v986, 1e-06
    %v1021 = vmax.f32 %v991, 1e-06
    %v1022 = vmax.f32 %v996, 1e-06
    %v1023 = vmax.f32 %v1001, 1e-06
    %v1024 = vmax.f32 %v1006, 1e-06
    %v1025 = vrcp.pop %v1009
    %v1026 = vrcp.pop %v1010
    %v1027 = vrcp.pop %v1011
    %v1028 = vrcp.pop %v1012
    %v1029 = vrcp.pop %v1013
    %v1030 = vrcp.pop %v1014
    %v1031 = vrcp.pop %v1015
    %v1032 = vrcp.pop %v1016
    %v1033 = vrcp.pop %v1017
    %v1034 = vrcp.pop %v1018
    %v1035 = vrcp.pop %v1019
    %v1036 = vrcp.pop %v1020
    %v1037 = vrcp.pop %v1021
    %v1038 = vrcp.pop %v1022
    %v1039 = vrcp.pop %v1023
    %v1040 = vrcp.pop %v1024
    %1042 = vset.pattern.permute.xlu0 16
    %1043 = vperm.xlu0 %1042, %v1025
    %v1044 = vpop.permute.xlu0 %1043
    %1047 = vset.pattern.permute.xlu0 16
    %1048 = vperm.xlu0 %1047, %v1026
    %v1049 = vpop.permute.xlu0 %1048
    %1052 = vset.pattern.permute.xlu0 16
    %1053 = vperm.xlu0 %1052, %v1027
    %v1054 = vpop.permute.xlu0 %1053
    %1057 = vset.pattern.permute.xlu0 16
    %1058 = vperm.xlu0 %1057, %v1028
    %v1059 = vpop.permute.xlu0 %1058
    %1062 = vset.pattern.permute.xlu0 16
    %1063 = vperm.xlu0 %1062, %v1029
    %v1064 = vpop.permute.xlu0 %1063
    %1067 = vset.pattern.permute.xlu0 16
    %1068 = vperm.xlu0 %1067, %v1030
    %v1069 = vpop.permute.xlu0 %1068
    %1072 = vset.pattern.permute.xlu0 16
    %1073 = vperm.xlu0 %1072, %v1031
    %v1074 = vpop.permute.xlu0 %1073
    %1077 = vset.pattern.permute.xlu0 16
    %1078 = vperm.xlu0 %1077, %v1032
    %v1079 = vpop.permute.xlu0 %1078
    %1082 = vset.pattern.permute.xlu0 16
    %1083 = vperm.xlu0 %1082, %v1033
    %v1084 = vpop.permute.xlu0 %1083
    %1087 = vset.pattern.permute.xlu0 16
    %1088 = vperm.xlu0 %1087, %v1034
    %v1089 = vpop.permute.xlu0 %1088
    %1092 = vset.pattern.permute.xlu0 16
    %1093 = vperm.xlu0 %1092, %v1035
    %v1094 = vpop.permute.xlu0 %1093
    %1097 = vset.pattern.permute.xlu0 16
    %1098 = vperm.xlu0 %1097, %v1036
    %v1099 = vpop.permute.xlu0 %1098
    %1102 = vset.pattern.permute.xlu0 16
    %1103 = vperm.xlu0 %1102, %v1037
    %v1104 = vpop.permute.xlu0 %1103
    %1107 = vset.pattern.permute.xlu0 16
    %1108 = vperm.xlu0 %1107, %v1038
    %v1109 = vpop.permute.xlu0 %1108
    %1112 = vset.pattern.permute.xlu0 16
    %1113 = vperm.xlu0 %1112, %v1039
    %v1114 = vpop.permute.xlu0 %1113
    %1117 = vset.pattern.permute.xlu0 16
    %1118 = vperm.xlu0 %1117, %v1040
    %v1119 = vpop.permute.xlu0 %1118
    %v1121 = vmul.f32 %v931, %v1044
    %v1122 = vmul.f32 %v936, %v1049
    %v1123 = vmul.f32 %v941, %v1054
    %v1124 = vmul.f32 %v946, %v1059
    %v1125 = vmul.f32 %v951, %v1064
    %v1126 = vmul.f32 %v956, %v1069
    %v1127 = vmul.f32 %v961, %v1074
    %v1128 = vmul.f32 %v966, %v1079
    %v1129 = vmul.f32 %v971, %v1084
    %v1130 = vmul.f32 %v976, %v1089
    %v1131 = vmul.f32 %v981, %v1094
    %v1132 = vmul.f32 %v986, %v1099
    %v1133 = vmul.f32 %v991, %v1104
    %v1134 = vmul.f32 %v996, %v1109
    %v1135 = vmul.f32 %v1001, %v1114
    %v1136 = vmul.f32 %v1006, %v1119
    %vm1137 = vcmp.gt.f32.partialorder %v1121, 0.0
    %vm1138 = vcmp.gt.f32.partialorder %v1122, 0.0
    %vm1139 = vcmp.gt.f32.partialorder %v1123, 0.0
    %vm1140 = vcmp.gt.f32.partialorder %v1124, 0.0
    %vm1141 = vcmp.gt.f32.partialorder %v1125, 0.0
    %vm1142 = vcmp.gt.f32.partialorder %v1126, 0.0
    %vm1143 = vcmp.gt.f32.partialorder %v1127, 0.0
    %vm1144 = vcmp.gt.f32.partialorder %v1128, 0.0
    %vm1145 = vcmp.gt.f32.partialorder %v1129, 0.0
    %vm1146 = vcmp.gt.f32.partialorder %v1130, 0.0
    %vm1147 = vcmp.gt.f32.partialorder %v1131, 0.0
    %vm1148 = vcmp.gt.f32.partialorder %v1132, 0.0
    %vm1149 = vcmp.gt.f32.partialorder %v1133, 0.0
    %vm1150 = vcmp.gt.f32.partialorder %v1134, 0.0
    %vm1151 = vcmp.gt.f32.partialorder %v1135, 0.0
    %vm1152 = vcmp.gt.f32.partialorder %v1136, 0.0
    %v1153 = vmin.f32 %v1121, 0.0
    %v1154 = vmin.f32 %v1122, 0.0
    %v1155 = vmin.f32 %v1123, 0.0
    %v1156 = vmin.f32 %v1124, 0.0
    %v1157 = vmin.f32 %v1125, 0.0
    %v1158 = vmin.f32 %v1126, 0.0
    %v1159 = vmin.f32 %v1127, 0.0
    %v1160 = vmin.f32 %v1128, 0.0
    %v1161 = vmin.f32 %v1129, 0.0
    %v1162 = vmin.f32 %v1130, 0.0
    %v1163 = vmin.f32 %v1131, 0.0
    %v1164 = vmin.f32 %v1132, 0.0
    %v1165 = vmin.f32 %v1133, 0.0
    %v1166 = vmin.f32 %v1134, 0.0
    %v1167 = vmin.f32 %v1135, 0.0
    %v1168 = vmin.f32 %v1136, 0.0
    %v1169 = vmul.f32 %v1153, 1.442695
    %v1170 = vpow.pop %v1169
    %v1171 = vmul.f32 %v1154, 1.442695
    %v1172 = vpow.pop %v1171
    %v1173 = vmul.f32 %v1155, 1.442695
    %v1174 = vpow.pop %v1173
    %v1175 = vmul.f32 %v1156, 1.442695
    %v1176 = vpow.pop %v1175
    %v1177 = vmul.f32 %v1157, 1.442695
    %v1178 = vpow.pop %v1177
    %v1179 = vmul.f32 %v1158, 1.442695
    %v1180 = vpow.pop %v1179
    %v1181 = vmul.f32 %v1159, 1.442695
    %v1182 = vpow.pop %v1181
    %v1183 = vmul.f32 %v1160, 1.442695
    %v1184 = vpow.pop %v1183
    %v1185 = vmul.f32 %v1161, 1.442695
    %v1186 = vpow.pop %v1185
    %v1187 = vmul.f32 %v1162, 1.442695
    %v1188 = vpow.pop %v1187
    %v1189 = vmul.f32 %v1163, 1.442695
    %v1190 = vpow.pop %v1189
    %v1191 = vmul.f32 %v1164, 1.442695
    %v1192 = vpow.pop %v1191
    %v1193 = vmul.f32 %v1165, 1.442695
    %v1194 = vpow.pop %v1193
    %v1195 = vmul.f32 %v1166, 1.442695
    %v1196 = vpow.pop %v1195
    %v1197 = vmul.f32 %v1167, 1.442695
    %v1198 = vpow.pop %v1197
    %v1199 = vmul.f32 %v1168, 1.442695
    %v1200 = vpow.pop %v1199
    %v1201 = vsub.f32 %v1170, 1.0
    %v1202 = vsub.f32 %v1172, 1.0
    %v1203 = vsub.f32 %v1174, 1.0
    %v1204 = vsub.f32 %v1176, 1.0
    %v1205 = vsub.f32 %v1178, 1.0
    %v1206 = vsub.f32 %v1180, 1.0
    %v1207 = vsub.f32 %v1182, 1.0
    %v1208 = vsub.f32 %v1184, 1.0
    %v1209 = vsub.f32 %v1186, 1.0
    %v1210 = vsub.f32 %v1188, 1.0
    %v1211 = vsub.f32 %v1190, 1.0
    %v1212 = vsub.f32 %v1192, 1.0
    %v1213 = vsub.f32 %v1194, 1.0
    %v1214 = vsub.f32 %v1196, 1.0
    %v1215 = vsub.f32 %v1198, 1.0
    %v1216 = vsub.f32 %v1200, 1.0
    %v1217 = vsel %vm1137, %v1121, %v1201
    %v1218 = vsel %vm1138, %v1122, %v1202
    %v1219 = vsel %vm1139, %v1123, %v1203
    %v1220 = vsel %vm1140, %v1124, %v1204
    %v1221 = vsel %vm1141, %v1125, %v1205
    %v1222 = vsel %vm1142, %v1126, %v1206
    %v1223 = vsel %vm1143, %v1127, %v1207
    %v1224 = vsel %vm1144, %v1128, %v1208
    %v1225 = vsel %vm1145, %v1129, %v1209
    %v1226 = vsel %vm1146, %v1130, %v1210
    %v1227 = vsel %vm1147, %v1131, %v1211
    %v1228 = vsel %vm1148, %v1132, %v1212
    %v1229 = vsel %vm1149, %v1133, %v1213
    %v1230 = vsel %vm1150, %v1134, %v1214
    %v1231 = vsel %vm1151, %v1135, %v1215
    %v1232 = vsel %vm1152, %v1136, %v1216
    %v1233 = vld [vmem:[#allocation11] sm:$0xff]
    %v1234 = vld [vmem:[#allocation11 + $0x8] sm:$0xff]
    %vm1235 = vcmask 130048
    %v1237 = vsel %vm1235, %v800, 0
    %v1240 = vsel %vm1235, %v801, 0
    %v1243 = vsel %vm1235, %v802, 0
    %v1246 = vsel %vm1235, %v803, 0
    %v1249 = vsel %vm1235, %v804, 0
    %v1252 = vsel %vm1235, %v805, 0
    %v1255 = vsel %vm1235, %v806, 0
    %v1258 = vsel %vm1235, %v807, 0
    %v1261 = vsel %vm1235, %v808, 0
    %v1264 = vsel %vm1235, %v809, 0
    %v1267 = vsel %vm1235, %v810, 0
    %v1270 = vsel %vm1235, %v811, 0
    %v1273 = vsel %vm1235, %v812, 0
    %v1276 = vsel %vm1235, %v813, 0
    %v1279 = vsel %vm1235, %v814, 0
    %v1282 = vsel %vm1235, %v815, 0
    %1284 = vmatprep.subr.mxu0 0.0
    %1285 = vmatpush1.msra.mxu0 %v1233
    %1286 = vmatprep.subr.mxu0 0.0
    %1287 = vmatpush1.msra.mxu0 %v1234
    %1288 = vmatprep.subr.mxu0 0.0
    %1289 = vmatpush1.msra.mxu0 0.0
    %1290 = vmatprep.subr.mxu0 0.0
    %1291 = vmatpush1.msra.mxu0 0.0
    %1292 = vmatprep.subr.mxu0 0.0
    %1293 = vmatpush1.msra.mxu0 0.0
    %1294 = vmatprep.subr.mxu0 0.0
    %1295 = vmatpush1.msra.mxu0 0.0
    %1296 = vmatprep.subr.mxu0 0.0
    %1297 = vmatpush1.msra.mxu0 0.0
    %1298 = vmatprep.subr.mxu0 0.0
    %1299 = vmatpush1.msra.mxu0 0.0
    %1300 = vmatprep.subr.mxu0 0.0
    %1301 = vmatpush1.msra.mxu0 0.0
    %1302 = vmatprep.subr.mxu0 0.0
    %1303 = vmatpush1.msra.mxu0 0.0
    %1304 = vmatprep.subr.mxu0 0.0
    %1305 = vmatpush1.msra.mxu0 0.0
    %1306 = vmatprep.subr.mxu0 0.0
    %1307 = vmatpush1.msra.mxu0 0.0
    %1308 = vmatprep.subr.mxu0 0.0
    %1309 = vmatpush1.msra.mxu0 0.0
    %1310 = vmatprep.subr.mxu0 0.0
    %1311 = vmatpush1.msra.mxu0 0.0
    %1312 = vmatprep.subr.mxu0 0.0
    %1313 = vmatpush1.msra.mxu0 0.0
    %1314 = vmatprep.subr.mxu0 0.0
    %1315 = vmatpush1.msra.mxu0 0.0
    %1316 = vmatprep.subr.mxu0 0.0
    %1317 = vmatpush1.msra.mxu0 0.0
    %1318 = vmatprep.subr.mxu0 0.0
    %1319 = vmatpush1.msra.mxu0 0.0
    %1320 = vmatprep.subr.mxu0 0.0
    %1321 = vmatpush1.msra.mxu0 0.0
    %1322 = vmatprep.subr.mxu0 0.0
    %1323 = vmatpush1.msra.mxu0 0.0
    %1324 = vmatprep.subr.mxu0 0.0
    %1325 = vmatpush1.msra.mxu0 0.0
    %1326 = vmatprep.subr.mxu0 0.0
    %1327 = vmatpush1.msra.mxu0 0.0
    %1328 = vmatprep.subr.mxu0 0.0
    %1329 = vmatpush1.msra.mxu0 0.0
    %1330 = vmatprep.subr.mxu0 0.0
    %1331 = vmatpush1.msra.mxu0 0.0
    %1332 = vmatprep.subr.mxu0 0.0
    %1333 = vmatpush1.msra.mxu0 0.0
    %1334 = vmatprep.subr.mxu0 0.0
    %1335 = vmatpush1.msra.mxu0 0.0
    %1336 = vmatprep.subr.mxu0 0.0
    %1337 = vmatpush1.msra.mxu0 0.0
    %1338 = vmatprep.subr.mxu0 0.0
    %1339 = vmatpush1.msra.mxu0 0.0
    %1340 = vmatprep.subr.mxu0 0.0
    %1341 = vmatpush1.msra.mxu0 0.0
    %1342 = vmatprep.subr.mxu0 0.0
    %1343 = vmatpush1.msra.mxu0 0.0
    %1344 = vmatprep.subr.mxu0 0.0
    %1345 = vmatpush1.msra.mxu0 0.0
    %1346 = vmatprep.subr.mxu0 0.0
    %1347 = vmatpush1.msra.mxu0 0.0
    %1348 = vmatprep.mubr.f32.mxu0 0.0
    %1349 = vmatmul.mubr.f32.gmra.mrb[0].mxu0 %v1237
    %v1350 = vpop.f32.mrb[0].mxu0
    %v1351 = vadd.f32 0.0, %v1350
    %v1352 = vpop.f32.mrb[0].mxu0
    %1353 = vmatprep.mubr.f32.mxu0 0.0
    %1354 = vmatmul.mubr.f32.gmra.mrb[0].mxu0 %v1240
    %v1355 = vpop.f32.mrb[0].mxu0
    %v1356 = vadd.f32 0.0, %v1355
    %v1357 = vpop.f32.mrb[0].mxu0
    %1358 = vmatprep.mubr.f32.mxu0 0.0
    %1359 = vmatmul.mubr.f32.gmra.mrb[0].mxu0 %v1243
    %v1360 = vpop.f32.mrb[0].mxu0
    %v1361 = vadd.f32 0.0, %v1360
    %v1362 = vpop.f32.mrb[0].mxu0
    %1363 = vmatprep.mubr.f32.mxu0 0.0
    %1364 = vmatmul.mubr.f32.gmra.mrb[0].mxu0 %v1246
    %v1365 = vpop.f32.mrb[0].mxu0
    %v1366 = vadd.f32 0.0, %v1365
    %v1367 = vpop.f32.mrb[0].mxu0
    %1368 = vmatprep.mubr.f32.mxu0 0.0
    %1369 = vmatmul.mubr.f32.gmra.mrb[0].mxu0 %v1249
    %v1370 = vpop.f32.mrb[0].mxu0
    %v1371 = vadd.f32 0.0, %v1370
    %v1372 = vpop.f32.mrb[0].mxu0
    %1373 = vmatprep.mubr.f32.mxu0 0.0
    %1374 = vmatmul.mubr.f32.gmra.mrb[0].mxu0 %v1252
    %v1375 = vpop.f32.mrb[0].mxu0
    %v1376 = vadd.f32 0.0, %v1375
    %v1377 = vpop.f32.mrb[0].mxu0
    %1378 = vmatprep.mubr.f32.mxu0 0.0
    %1379 = vmatmul.mubr.f32.gmra.mrb[0].mxu0 %v1255
    %v1380 = vpop.f32.mrb[0].mxu0
    %v1381 = vadd.f32 0.0, %v1380
    %v1382 = vpop.f32.mrb[0].mxu0
    %1383 = vmatprep.mubr.f32.mxu0 0.0
    %1384 = vmatmul.mubr.f32.gmra.mrb[0].mxu0 %v1258
    %v1385 = vpop.f32.mrb[0].mxu0
    %v1386 = vadd.f32 0.0, %v1385
    %v1387 = vpop.f32.mrb[0].mxu0
    %1388 = vmatprep.mubr.f32.mxu0 0.0
    %1389 = vmatmul.mubr.f32.gmra.mrb[0].mxu0 %v1261
    %v1390 = vpop.f32.mrb[0].mxu0
    %v1391 = vadd.f32 0.0, %v1390
    %v1392 = vpop.f32.mrb[0].mxu0
    %1393 = vmatprep.mubr.f32.mxu0 0.0
    %1394 = vmatmul.mubr.f32.gmra.mrb[0].mxu0 %v1264
    %v1395 = vpop.f32.mrb[0].mxu0
    %v1396 = vadd.f32 0.0, %v1395
    %v1397 = vpop.f32.mrb[0].mxu0
    %1398 = vmatprep.mubr.f32.mxu0 0.0
    %1399 = vmatmul.mubr.f32.gmra.mrb[0].mxu0 %v1267
    %v1400 = vpop.f32.mrb[0].mxu0
    %v1401 = vadd.f32 0.0, %v1400
    %v1402 = vpop.f32.mrb[0].mxu0
    %1403 = vmatprep.mubr.f32.mxu0 0.0
    %1404 = vmatmul.mubr.f32.gmra.mrb[0].mxu0 %v1270
    %v1405 = vpop.f32.mrb[0].mxu0
    %v1406 = vadd.f32 0.0, %v1405
    %v1407 = vpop.f32.mrb[0].mxu0
    %1408 = vmatprep.mubr.f32.mxu0 0.0
    %1409 = vmatmul.mubr.f32.gmra.mrb[0].mxu0 %v1273
    %v1410 = vpop.f32.mrb[0].mxu0
    %v1411 = vadd.f32 0.0, %v1410
    %v1412 = vpop.f32.mrb[0].mxu0
    %1413 = vmatprep.mubr.f32.mxu0 0.0
    %1414 = vmatmul.mubr.f32.gmra.mrb[0].mxu0 %v1276
    %v1415 = vpop.f32.mrb[0].mxu0
    %v1416 = vadd.f32 0.0, %v1415
    %v1417 = vpop.f32.mrb[0].mxu0
    %1418 = vmatprep.mubr.f32.mxu0 0.0
    %1419 = vmatmul.mubr.f32.gmra.mrb[0].mxu0 %v1279
    %v1420 = vpop.f32.mrb[0].mxu0
    %v1421 = vadd.f32 0.0, %v1420
    %v1422 = vpop.f32.mrb[0].mxu0
    %1423 = vmatprep.mubr.f32.mxu0 0.0
    %1424 = vmatmul.mubr.f32.gmra.mrb[0].mxu0 %v1282
    %v1425 = vpop.f32.mrb[0].mxu0
    %v1426 = vadd.f32 0.0, %v1425
    %v1427 = vpop.f32.mrb[0].mxu0
    %1428 = vdwg.mxu0
    %v1430 = vsel %vm1235, %v1217, 0
    %v1433 = vsel %vm1235, %v1218, 0
    %v1436 = vsel %vm1235, %v1219, 0
    %v1439 = vsel %vm1235, %v1220, 0
    %v1442 = vsel %vm1235, %v1221, 0
    %v1445 = vsel %vm1235, %v1222, 0
    %v1448 = vsel %vm1235, %v1223, 0
    %v1451 = vsel %vm1235, %v1224, 0
    %v1454 = vsel %vm1235, %v1225, 0
    %v1457 = vsel %vm1235, %v1226, 0
    %v1460 = vsel %vm1235, %v1227, 0
    %v1463 = vsel %vm1235, %v1228, 0
    %v1466 = vsel %vm1235, %v1229, 0
    %v1469 = vsel %vm1235, %v1230, 0
    %v1472 = vsel %vm1235, %v1231, 0
    %v1475 = vsel %vm1235, %v1232, 0
    %1477 = vmatprep.subr.mxu0 0.0
    %1478 = vmatpush1.msra.mxu0 %v1233
    %1479 = vmatprep.subr.mxu0 0.0
    %1480 = vmatpush1.msra.mxu0 %v1234
    %1481 = vmatprep.subr.mxu0 0.0
    %1482 = vmatpush1.msra.mxu0 0.0
    %1483 = vmatprep.subr.mxu0 0.0
    %1484 = vmatpush1.msra.mxu0 0.0
    %1485 = vmatprep.subr.mxu0 0.0
    %1486 = vmatpush1.msra.mxu0 0.0
    %1487 = vmatprep.subr.mxu0 0.0
    %1488 = vmatpush1.msra.mxu0 0.0
    %1489 = vmatprep.subr.mxu0 0.0
    %1490 = vmatpush1.msra.mxu0 0.0
    %1491 = vmatprep.subr.mxu0 0.0
    %1492 = vmatpush1.msra.mxu0 0.0
    %1493 = vmatprep.subr.mxu0 0.0
    %1494 = vmatpush1.msra.mxu0 0.0
    %1495 = vmatprep.subr.mxu0 0.0
    %1496 = vmatpush1.msra.mxu0 0.0
    %1497 = vmatprep.subr.mxu0 0.0
    %1498 = vmatpush1.msra.mxu0 0.0
    %1499 = vmatprep.subr.mxu0 0.0
    %1500 = vmatpush1.msra.mxu0 0.0
    %1501 = vmatprep.subr.mxu0 0.0
    %1502 = vmatpush1.msra.mxu0 0.0
    %1503 = vmatprep.subr.mxu0 0.0
    %1504 = vmatpush1.msra.mxu0 0.0
    %1505 = vmatprep.subr.mxu0 0.0
    %1506 = vmatpush1.msra.mxu0 0.0
    %1507 = vmatprep.subr.mxu0 0.0
    %1508 = vmatpush1.msra.mxu0 0.0
    %1509 = vmatprep.subr.mxu0 0.0
    %1510 = vmatpush1.msra.mxu0 0.0
    %1511 = vmatprep.subr.mxu0 0.0
    %1512 = vmatpush1.msra.mxu0 0.0
    %1513 = vmatprep.subr.mxu0 0.0
    %1514 = vmatpush1.msra.mxu0 0.0
    %1515 = vmatprep.subr.mxu0 0.0
    %1516 = vmatpush1.msra.mxu0 0.0
    %1517 = vmatprep.subr.mxu0 0.0
    %1518 = vmatpush1.msra.mxu0 0.0
    %1519 = vmatprep.subr.mxu0 0.0
    %1520 = vmatpush1.msra.mxu0 0.0
    %1521 = vmatprep.subr.mxu0 0.0
    %1522 = vmatpush1.msra.mxu0 0.0
    %1523 = vmatprep.subr.mxu0 0.0
    %1524 = vmatpush1.msra.mxu0 0.0
    %1525 = vmatprep.subr.mxu0 0.0
    %1526 = vmatpush1.msra.mxu0 0.0
    %1527 = vmatprep.subr.mxu0 0.0
    %1528 = vmatpush1.msra.mxu0 0.0
    %1529 = vmatprep.subr.mxu0 0.0
    %1530 = vmatpush1.msra.mxu0 0.0
    %1531 = vmatprep.subr.mxu0 0.0
    %1532 = vmatpush1.msra.mxu0 0.0
    %1533 = vmatprep.subr.mxu0 0.0
    %1534 = vmatpush1.msra.mxu0 0.0
    %1535 = vmatprep.subr.mxu0 0.0
    %1536 = vmatpush1.msra.mxu0 0.0
    %1537 = vmatprep.subr.mxu0 0.0
    %1538 = vmatpush1.msra.mxu0 0.0
    %1539 = vmatprep.subr.mxu0 0.0
    %1540 = vmatpush1.msra.mxu0 0.0
    %1541 = vmatprep.mubr.f32.mxu0 0.0
    %1542 = vmatmul.mubr.f32.gmra.mrb[0].mxu0 %v1430
    %v1543 = vpop.f32.mrb[0].mxu0
    %v1544 = vadd.f32 0.0, %v1543
    %v1545 = vpop.f32.mrb[0].mxu0
    %1546 = vmatprep.mubr.f32.mxu0 0.0
    %1547 = vmatmul.mubr.f32.gmra.mrb[0].mxu0 %v1433
    %v1548 = vpop.f32.mrb[0].mxu0
    %v1549 = vadd.f32 0.0, %v1548
    %v1550 = vpop.f32.mrb[0].mxu0
    %1551 = vmatprep.mubr.f32.mxu0 0.0
    %1552 = vmatmul.mubr.f32.gmra.mrb[0].mxu0 %v1436
    %v1553 = vpop.f32.mrb[0].mxu0
    %v1554 = vadd.f32 0.0, %v1553
    %v1555 = vpop.f32.mrb[0].mxu0
    %1556 = vmatprep.mubr.f32.mxu0 0.0
    %1557 = vmatmul.mubr.f32.gmra.mrb[0].mxu0 %v1439
    %v1558 = vpop.f32.mrb[0].mxu0
    %v1559 = vadd.f32 0.0, %v1558
    %v1560 = vpop.f32.mrb[0].mxu0
    %1561 = vmatprep.mubr.f32.mxu0 0.0
    %1562 = vmatmul.mubr.f32.gmra.mrb[0].mxu0 %v1442
    %v1563 = vpop.f32.mrb[0].mxu0
    %v1564 = vadd.f32 0.0, %v1563
    %v1565 = vpop.f32.mrb[0].mxu0
    %1566 = vmatprep.mubr.f32.mxu0 0.0
    %1567 = vmatmul.mubr.f32.gmra.mrb[0].mxu0 %v1445
    %v1568 = vpop.f32.mrb[0].mxu0
    %v1569 = vadd.f32 0.0, %v1568
    %v1570 = vpop.f32.mrb[0].mxu0
    %1571 = vmatprep.mubr.f32.mxu0 0.0
    %1572 = vmatmul.mubr.f32.gmra.mrb[0].mxu0 %v1448
    %v1573 = vpop.f32.mrb[0].mxu0
    %v1574 = vadd.f32 0.0, %v1573
    %v1575 = vpop.f32.mrb[0].mxu0
    %1576 = vmatprep.mubr.f32.mxu0 0.0
    %1577 = vmatmul.mubr.f32.gmra.mrb[0].mxu0 %v1451
    %v1578 = vpop.f32.mrb[0].mxu0
    %v1579 = vadd.f32 0.0, %v1578
    %v1580 = vpop.f32.mrb[0].mxu0
    %1581 = vmatprep.mubr.f32.mxu0 0.0
    %1582 = vmatmul.mubr.f32.gmra.mrb[0].mxu0 %v1454
    %v1583 = vpop.f32.mrb[0].mxu0
    %v1584 = vadd.f32 0.0, %v1583
    %v1585 = vpop.f32.mrb[0].mxu0
    %1586 = vmatprep.mubr.f32.mxu0 0.0
    %1587 = vmatmul.mubr.f32.gmra.mrb[0].mxu0 %v1457
    %v1588 = vpop.f32.mrb[0].mxu0
    %v1589 = vadd.f32 0.0, %v1588
    %v1590 = vpop.f32.mrb[0].mxu0
    %1591 = vmatprep.mubr.f32.mxu0 0.0
    %1592 = vmatmul.mubr.f32.gmra.mrb[0].mxu0 %v1460
    %v1593 = vpop.f32.mrb[0].mxu0
    %v1594 = vadd.f32 0.0, %v1593
    %v1595 = vpop.f32.mrb[0].mxu0
    %1596 = vmatprep.mubr.f32.mxu0 0.0
    %1597 = vmatmul.mubr.f32.gmra.mrb[0].mxu0 %v1463
    %v1598 = vpop.f32.mrb[0].mxu0
    %v1599 = vadd.f32 0.0, %v1598
    %v1600 = vpop.f32.mrb[0].mxu0
    %1601 = vmatprep.mubr.f32.mxu0 0.0
    %1602 = vmatmul.mubr.f32.gmra.mrb[0].mxu0 %v1466
    %v1603 = vpop.f32.mrb[0].mxu0
    %v1604 = vadd.f32 0.0, %v1603
    %v1605 = vpop.f32.mrb[0].mxu0
    %1606 = vmatprep.mubr.f32.mxu0 0.0
    %1607 = vmatmul.mubr.f32.gmra.mrb[0].mxu0 %v1469
    %v1608 = vpop.f32.mrb[0].mxu0
    %v1609 = vadd.f32 0.0, %v1608
    %v1610 = vpop.f32.mrb[0].mxu0
    %1611 = vmatprep.mubr.f32.mxu0 0.0
    %1612 = vmatmul.mubr.f32.gmra.mrb[0].mxu0 %v1472
    %v1613 = vpop.f32.mrb[0].mxu0
    %v1614 = vadd.f32 0.0, %v1613
    %v1615 = vpop.f32.mrb[0].mxu0
    %1616 = vmatprep.mubr.f32.mxu0 0.0
    %1617 = vmatmul.mubr.f32.gmra.mrb[0].mxu0 %v1475
    %v1618 = vpop.f32.mrb[0].mxu0
    %v1619 = vadd.f32 0.0, %v1618
    %v1620 = vpop.f32.mrb[0].mxu0
    %1621 = vdwg.mxu0
    %v1622 = vld [vmem:[#allocation13] sm:$0xff]
    %v1623 = vld [vmem:[#allocation14] sm:$0x1]
    %v1625 = vlaneseq
    %v1626 = vshrl.u32 %v1625, 7
    %v1627 = vsub.s32 0, %v1626
    %v1628 = vrot.slane %v1623, %v1627
    %vm1630 = vcmask 64512
    %v1632 = vsel %vm1630, %v1351, 0
    %v1635 = vsel %vm1630, %v1356, 0
    %v1638 = vsel %vm1630, %v1361, 0
    %v1641 = vsel %vm1630, %v1366, 0
    %v1644 = vsel %vm1630, %v1371, 0
    %v1647 = vsel %vm1630, %v1376, 0
    %v1650 = vsel %vm1630, %v1381, 0
    %v1653 = vsel %vm1630, %v1386, 0
    %v1656 = vsel %vm1630, %v1391, 0
    %v1659 = vsel %vm1630, %v1396, 0
    %v1662 = vsel %vm1630, %v1401, 0
    %v1665 = vsel %vm1630, %v1406, 0
    %v1668 = vsel %vm1630, %v1411, 0
    %v1671 = vsel %vm1630, %v1416, 0
    %v1674 = vsel %vm1630, %v1421, 0
    %v1677 = vsel %vm1630, %v1426, 0
    %1679 = vmatprep.subr.mxu0 0.0
    %1680 = vmatpush1.msra.mxu0 %v1622
    %1681 = vmatprep.subr.mxu0 0.0
    %1682 = vmatpush1.msra.mxu0 0.0
    %1683 = vmatprep.subr.mxu0 0.0
    %1684 = vmatpush1.msra.mxu0 0.0
    %1685 = vmatprep.subr.mxu0 0.0
    %1686 = vmatpush1.msra.mxu0 0.0
    %1687 = vmatprep.subr.mxu0 0.0
    %1688 = vmatpush1.msra.mxu0 0.0
    %1689 = vmatprep.subr.mxu0 0.0
    %1690 = vmatpush1.msra.mxu0 0.0
    %1691 = vmatprep.subr.mxu0 0.0
    %1692 = vmatpush1.msra.mxu0 0.0
    %1693 = vmatprep.subr.mxu0 0.0
    %1694 = vmatpush1.msra.mxu0 0.0
    %1695 = vmatprep.subr.mxu0 0.0
    %1696 = vmatpush1.msra.mxu0 0.0
    %1697 = vmatprep.subr.mxu0 0.0
    %1698 = vmatpush1.msra.mxu0 0.0
    %1699 = vmatprep.subr.mxu0 0.0
    %1700 = vmatpush1.msra.mxu0 0.0
    %1701 = vmatprep.subr.mxu0 0.0
    %1702 = vmatpush1.msra.mxu0 0.0
    %1703 = vmatprep.subr.mxu0 0.0
    %1704 = vmatpush1.msra.mxu0 0.0
    %1705 = vmatprep.subr.mxu0 0.0
    %1706 = vmatpush1.msra.mxu0 0.0
    %1707 = vmatprep.subr.mxu0 0.0
    %1708 = vmatpush1.msra.mxu0 0.0
    %1709 = vmatprep.subr.mxu0 0.0
    %1710 = vmatpush1.msra.mxu0 0.0
    %1711 = vmatprep.subr.mxu0 0.0
    %1712 = vmatpush1.msra.mxu0 0.0
    %1713 = vmatprep.subr.mxu0 0.0
    %1714 = vmatpush1.msra.mxu0 0.0
    %1715 = vmatprep.subr.mxu0 0.0
    %1716 = vmatpush1.msra.mxu0 0.0
    %1717 = vmatprep.subr.mxu0 0.0
    %1718 = vmatpush1.msra.mxu0 0.0
    %1719 = vmatprep.subr.mxu0 0.0
    %1720 = vmatpush1.msra.mxu0 0.0
    %1721 = vmatprep.subr.mxu0 0.0
    %1722 = vmatpush1.msra.mxu0 0.0
    %1723 = vmatprep.subr.mxu0 0.0
    %1724 = vmatpush1.msra.mxu0 0.0
    %1725 = vmatprep.subr.mxu0 0.0
    %1726 = vmatpush1.msra.mxu0 0.0
    %1727 = vmatprep.subr.mxu0 0.0
    %1728 = vmatpush1.msra.mxu0 0.0
    %1729 = vmatprep.subr.mxu0 0.0
    %1730 = vmatpush1.msra.mxu0 0.0
    %1731 = vmatprep.subr.mxu0 0.0
    %1732 = vmatpush1.msra.mxu0 0.0
    %1733 = vmatprep.subr.mxu0 0.0
    %1734 = vmatpush1.msra.mxu0 0.0
    %1735 = vmatprep.subr.mxu0 0.0
    %1736 = vmatpush1.msra.mxu0 0.0
    %1737 = vmatprep.subr.mxu0 0.0
    %1738 = vmatpush1.msra.mxu0 0.0
    %1739 = vmatprep.subr.mxu0 0.0
    %1740 = vmatpush1.msra.mxu0 0.0
    %1741 = vmatprep.subr.mxu0 0.0
    %1742 = vmatpush1.msra.mxu0 0.0
    %1743 = vmatprep.mubr.f32.mxu0 0.0
    %1744 = vmatmul.mubr.f32.gmra.mrb[0].mxu0 %v1632
    %v1745 = vpop.f32.mrb[0].mxu0
    %v1746 = vadd.f32 %v1628, %v1745
    %v1747 = vpop.f32.mrb[0].mxu0
    %1748 = vmatprep.mubr.f32.mxu0 0.0
    %1749 = vmatmul.mubr.f32.gmra.mrb[0].mxu0 %v1635
    %v1750 = vpop.f32.mrb[0].mxu0
    %v1751 = vadd.f32 %v1628, %v1750
    %v1752 = vpop.f32.mrb[0].mxu0
    %1753 = vmatprep.mubr.f32.mxu0 0.0
    %1754 = vmatmul.mubr.f32.gmra.mrb[0].mxu0 %v1638
    %v1755 = vpop.f32.mrb[0].mxu0
    %v1756 = vadd.f32 %v1628, %v1755
    %v1757 = vpop.f32.mrb[0].mxu0
    %1758 = vmatprep.mubr.f32.mxu0 0.0
    %1759 = vmatmul.mubr.f32.gmra.mrb[0].mxu0 %v1641
    %v1760 = vpop.f32.mrb[0].mxu0
    %v1761 = vadd.f32 %v1628, %v1760
    %v1762 = vpop.f32.mrb[0].mxu0
    %1763 = vmatprep.mubr.f32.mxu0 0.0
    %1764 = vmatmul.mubr.f32.gmra.mrb[0].mxu0 %v1644
    %v1765 = vpop.f32.mrb[0].mxu0
    %v1766 = vadd.f32 %v1628, %v1765
    %v1767 = vpop.f32.mrb[0].mxu0
    %1768 = vmatprep.mubr.f32.mxu0 0.0
    %1769 = vmatmul.mubr.f32.gmra.mrb[0].mxu0 %v1647
    %v1770 = vpop.f32.mrb[0].mxu0
    %v1771 = vadd.f32 %v1628, %v1770
    %v1772 = vpop.f32.mrb[0].mxu0
    %1773 = vmatprep.mubr.f32.mxu0 0.0
    %1774 = vmatmul.mubr.f32.gmra.mrb[0].mxu0 %v1650
    %v1775 = vpop.f32.mrb[0].mxu0
    %v1776 = vadd.f32 %v1628, %v1775
    %v1777 = vpop.f32.mrb[0].mxu0
    %1778 = vmatprep.mubr.f32.mxu0 0.0
    %1779 = vmatmul.mubr.f32.gmra.mrb[0].mxu0 %v1653
    %v1780 = vpop.f32.mrb[0].mxu0
    %v1781 = vadd.f32 %v1628, %v1780
    %v1782 = vpop.f32.mrb[0].mxu0
    %1783 = vmatprep.mubr.f32.mxu0 0.0
    %1784 = vmatmul.mubr.f32.gmra.mrb[0].mxu0 %v1656
    %v1785 = vpop.f32.mrb[0].mxu0
    %v1786 = vadd.f32 %v1628, %v1785
    %v1787 = vpop.f32.mrb[0].mxu0
    %1788 = vmatprep.mubr.f32.mxu0 0.0
    %1789 = vmatmul.mubr.f32.gmra.mrb[0].mxu0 %v1659
    %v1790 = vpop.f32.mrb[0].mxu0
    %v1791 = vadd.f32 %v1628, %v1790
    %v1792 = vpop.f32.mrb[0].mxu0
    %1793 = vmatprep.mubr.f32.mxu0 0.0
    %1794 = vmatmul.mubr.f32.gmra.mrb[0].mxu0 %v1662
    %v1795 = vpop.f32.mrb[0].mxu0
    %v1796 = vadd.f32 %v1628, %v1795
    %v1797 = vpop.f32.mrb[0].mxu0
    %1798 = vmatprep.mubr.f32.mxu0 0.0
    %1799 = vmatmul.mubr.f32.gmra.mrb[0].mxu0 %v1665
    %v1800 = vpop.f32.mrb[0].mxu0
    %v1801 = vadd.f32 %v1628, %v1800
    %v1802 = vpop.f32.mrb[0].mxu0
    %1803 = vmatprep.mubr.f32.mxu0 0.0
    %1804 = vmatmul.mubr.f32.gmra.mrb[0].mxu0 %v1668
    %v1805 = vpop.f32.mrb[0].mxu0
    %v1806 = vadd.f32 %v1628, %v1805
    %v1807 = vpop.f32.mrb[0].mxu0
    %1808 = vmatprep.mubr.f32.mxu0 0.0
    %1809 = vmatmul.mubr.f32.gmra.mrb[0].mxu0 %v1671
    %v1810 = vpop.f32.mrb[0].mxu0
    %v1811 = vadd.f32 %v1628, %v1810
    %v1812 = vpop.f32.mrb[0].mxu0
    %1813 = vmatprep.mubr.f32.mxu0 0.0
    %1814 = vmatmul.mubr.f32.gmra.mrb[0].mxu0 %v1674
    %v1815 = vpop.f32.mrb[0].mxu0
    %v1816 = vadd.f32 %v1628, %v1815
    %v1817 = vpop.f32.mrb[0].mxu0
    %1818 = vmatprep.mubr.f32.mxu0 0.0
    %1819 = vmatmul.mubr.f32.gmra.mrb[0].mxu0 %v1677
    %v1820 = vpop.f32.mrb[0].mxu0
    %v1821 = vadd.f32 %v1628, %v1820
    %v1822 = vpop.f32.mrb[0].mxu0
    %1823 = vdwg.mxu0
    %vm1824 = vcmp.gt.f32.partialorder %v1746, 0.0
    %vm1825 = vcmp.gt.f32.partialorder %v1751, 0.0
    %vm1826 = vcmp.gt.f32.partialorder %v1756, 0.0
    %vm1827 = vcmp.gt.f32.partialorder %v1761, 0.0
    %vm1828 = vcmp.gt.f32.partialorder %v1766, 0.0
    %vm1829 = vcmp.gt.f32.partialorder %v1771, 0.0
    %vm1830 = vcmp.gt.f32.partialorder %v1776, 0.0
    %vm1831 = vcmp.gt.f32.partialorder %v1781, 0.0
    %vm1832 = vcmp.gt.f32.partialorder %v1786, 0.0
    %vm1833 = vcmp.gt.f32.partialorder %v1791, 0.0
    %vm1834 = vcmp.gt.f32.partialorder %v1796, 0.0
    %vm1835 = vcmp.gt.f32.partialorder %v1801, 0.0
    %vm1836 = vcmp.gt.f32.partialorder %v1806, 0.0
    %vm1837 = vcmp.gt.f32.partialorder %v1811, 0.0
    %vm1838 = vcmp.gt.f32.partialorder %v1816, 0.0
    %vm1839 = vcmp.gt.f32.partialorder %v1821, 0.0
    %v1840 = vmin.f32 %v1746, 0.0
    %v1841 = vmin.f32 %v1751, 0.0
    %v1842 = vmin.f32 %v1756, 0.0
    %v1843 = vmin.f32 %v1761, 0.0
    %v1844 = vmin.f32 %v1766, 0.0
    %v1845 = vmin.f32 %v1771, 0.0
    %v1846 = vmin.f32 %v1776, 0.0
    %v1847 = vmin.f32 %v1781, 0.0
    %v1848 = vmin.f32 %v1786, 0.0
    %v1849 = vmin.f32 %v1791, 0.0
    %v1850 = vmin.f32 %v1796, 0.0
    %v1851 = vmin.f32 %v1801, 0.0
    %v1852 = vmin.f32 %v1806, 0.0
    %v1853 = vmin.f32 %v1811, 0.0
    %v1854 = vmin.f32 %v1816, 0.0
    %v1855 = vmin.f32 %v1821, 0.0
    %v1856 = vmul.f32 %v1840, 1.442695
    %v1857 = vpow.pop %v1856
    %v1858 = vmul.f32 %v1841, 1.442695
    %v1859 = vpow.pop %v1858
    %v1860 = vmul.f32 %v1842, 1.442695
    %v1861 = vpow.pop %v1860
    %v1862 = vmul.f32 %v1843, 1.442695
    %v1863 = vpow.pop %v1862
    %v1864 = vmul.f32 %v1844, 1.442695
    %v1865 = vpow.pop %v1864
    %v1866 = vmul.f32 %v1845, 1.442695
    %v1867 = vpow.pop %v1866
    %v1868 = vmul.f32 %v1846, 1.442695
    %v1869 = vpow.pop %v1868
    %v1870 = vmul.f32 %v1847, 1.442695
    %v1871 = vpow.pop %v1870
    %v1872 = vmul.f32 %v1848, 1.442695
    %v1873 = vpow.pop %v1872
    %v1874 = vmul.f32 %v1849, 1.442695
    %v1875 = vpow.pop %v1874
    %v1876 = vmul.f32 %v1850, 1.442695
    %v1877 = vpow.pop %v1876
    %v1878 = vmul.f32 %v1851, 1.442695
    %v1879 = vpow.pop %v1878
    %v1880 = vmul.f32 %v1852, 1.442695
    %v1881 = vpow.pop %v1880
    %v1882 = vmul.f32 %v1853, 1.442695
    %v1883 = vpow.pop %v1882
    %v1884 = vmul.f32 %v1854, 1.442695
    %v1885 = vpow.pop %v1884
    %v1886 = vmul.f32 %v1855, 1.442695
    %v1887 = vpow.pop %v1886
    %v1888 = vsub.f32 %v1857, 1.0
    %v1889 = vsub.f32 %v1859, 1.0
    %v1890 = vsub.f32 %v1861, 1.0
    %v1891 = vsub.f32 %v1863, 1.0
    %v1892 = vsub.f32 %v1865, 1.0
    %v1893 = vsub.f32 %v1867, 1.0
    %v1894 = vsub.f32 %v1869, 1.0
    %v1895 = vsub.f32 %v1871, 1.0
    %v1896 = vsub.f32 %v1873, 1.0
    %v1897 = vsub.f32 %v1875, 1.0
    %v1898 = vsub.f32 %v1877, 1.0
    %v1899 = vsub.f32 %v1879, 1.0
    %v1900 = vsub.f32 %v1881, 1.0
    %v1901 = vsub.f32 %v1883, 1.0
    %v1902 = vsub.f32 %v1885, 1.0
    %v1903 = vsub.f32 %v1887, 1.0
    %v1904 = vsel %vm1824, %v1746, %v1888
    %v1905 = vsel %vm1825, %v1751, %v1889
    %v1906 = vsel %vm1826, %v1756, %v1890
    %v1907 = vsel %vm1827, %v1761, %v1891
    %v1908 = vsel %vm1828, %v1766, %v1892
    %v1909 = vsel %vm1829, %v1771, %v1893
    %v1910 = vsel %vm1830, %v1776, %v1894
    %v1911 = vsel %vm1831, %v1781, %v1895
    %v1912 = vsel %vm1832, %v1786, %v1896
    %v1913 = vsel %vm1833, %v1791, %v1897
    %v1914 = vsel %vm1834, %v1796, %v1898
    %v1915 = vsel %vm1835, %v1801, %v1899
    %v1916 = vsel %vm1836, %v1806, %v1900
    %v1917 = vsel %vm1837, %v1811, %v1901
    %v1918 = vsel %vm1838, %v1816, %v1902
    %v1919 = vsel %vm1839, %v1821, %v1903
    %v1920 = vld [vmem:[#allocation16] sm:$0xff]
    %v1921 = vld [vmem:[#allocation16 + $0x8] sm:$0xff]
    %v1922 = vld [vmem:[#allocation17] sm:$0x1]
    %v1924 = vlaneseq
    %v1925 = vshrl.u32 %v1924, 7
    %v1926 = vsub.s32 0, %v1925
    %v1927 = vrot.slane %v1922, %v1926
    %v1930 = vsel %vm1235, %v1904, 0
    %v1933 = vsel %vm1235, %v1905, 0
    %v1936 = vsel %vm1235, %v1906, 0
    %v1939 = vsel %vm1235, %v1907, 0
    %v1942 = vsel %vm1235, %v1908, 0
    %v1945 = vsel %vm1235, %v1909, 0
    %v1948 = vsel %vm1235, %v1910, 0
    %v1951 = vsel %vm1235, %v1911, 0
    %v1954 = vsel %vm1235, %v1912, 0
    %v1957 = vsel %vm1235, %v1913, 0
    %v1960 = vsel %vm1235, %v1914, 0
    %v1963 = vsel %vm1235, %v1915, 0
    %v1966 = vsel %vm1235, %v1916, 0
    %v1969 = vsel %vm1235, %v1917, 0
    %v1972 = vsel %vm1235, %v1918, 0
    %v1975 = vsel %vm1235, %v1919, 0
    %1977 = vmatprep.subr.mxu0 0.0
    %1978 = vmatpush1.msra.mxu0 %v1920
    %1979 = vmatprep.subr.mxu0 0.0
    %1980 = vmatpush1.msra.mxu0 %v1921
    %1981 = vmatprep.subr.mxu0 0.0
    %1982 = vmatpush1.msra.mxu0 0.0
    %1983 = vmatprep.subr.mxu0 0.0
    %1984 = vmatpush1.msra.mxu0 0.0
    %1985 = vmatprep.subr.mxu0 0.0
    %1986 = vmatpush1.msra.mxu0 0.0
    %1987 = vmatprep.subr.mxu0 0.0
    %1988 = vmatpush1.msra.mxu0 0.0
    %1989 = vmatprep.subr.mxu0 0.0
    %1990 = vmatpush1.msra.mxu0 0.0
    %1991 = vmatprep.subr.mxu0 0.0
    %1992 = vmatpush1.msra.mxu0 0.0
    %1993 = vmatprep.subr.mxu0 0.0
    %1994 = vmatpush1.msra.mxu0 0.0
    %1995 = vmatprep.subr.mxu0 0.0
    %1996 = vmatpush1.msra.mxu0 0.0
    %1997 = vmatprep.subr.mxu0 0.0
    %1998 = vmatpush1.msra.mxu0 0.0
    %1999 = vmatprep.subr.mxu0 0.0
    %2000 = vmatpush1.msra.mxu0 0.0
    %2001 = vmatprep.subr.mxu0 0.0
    %2002 = vmatpush1.msra.mxu0 0.0
    %2003 = vmatprep.subr.mxu0 0.0
    %2004 = vmatpush1.msra.mxu0 0.0
    %2005 = vmatprep.subr.mxu0 0.0
    %2006 = vmatpush1.msra.mxu0 0.0
    %2007 = vmatprep.subr.mxu0 0.0
    %2008 = vmatpush1.msra.mxu0 0.0
    %2009 = vmatprep.subr.mxu0 0.0
    %2010 = vmatpush1.msra.mxu0 0.0
    %2011 = vmatprep.subr.mxu0 0.0
    %2012 = vmatpush1.msra.mxu0 0.0
    %2013 = vmatprep.subr.mxu0 0.0
    %2014 = vmatpush1.msra.mxu0 0.0
    %2015 = vmatprep.subr.mxu0 0.0
    %2016 = vmatpush1.msra.mxu0 0.0
    %2017 = vmatprep.subr.mxu0 0.0
    %2018 = vmatpush1.msra.mxu0 0.0
    %2019 = vmatprep.subr.mxu0 0.0
    %2020 = vmatpush1.msra.mxu0 0.0
    %2021 = vmatprep.subr.mxu0 0.0
    %2022 = vmatpush1.msra.mxu0 0.0
    %2023 = vmatprep.subr.mxu0 0.0
    %2024 = vmatpush1.msra.mxu0 0.0
    %2025 = vmatprep.subr.mxu0 0.0
    %2026 = vmatpush1.msra.mxu0 0.0
    %2027 = vmatprep.subr.mxu0 0.0
    %2028 = vmatpush1.msra.mxu0 0.0
    %2029 = vmatprep.subr.mxu0 0.0
    %2030 = vmatpush1.msra.mxu0 0.0
    %2031 = vmatprep.subr.mxu0 0.0
    %2032 = vmatpush1.msra.mxu0 0.0
    %2033 = vmatprep.subr.mxu0 0.0
    %2034 = vmatpush1.msra.mxu0 0.0
    %2035 = vmatprep.subr.mxu0 0.0
    %2036 = vmatpush1.msra.mxu0 0.0
    %2037 = vmatprep.subr.mxu0 0.0
    %2038 = vmatpush1.msra.mxu0 0.0
    %2039 = vmatprep.subr.mxu0 0.0
    %2040 = vmatpush1.msra.mxu0 0.0
    %2041 = vmatprep.mubr.f32.mxu0 0.0
    %2042 = vmatmul.mubr.f32.gmra.mrb[0].mxu0 %v1930
    %v2043 = vpop.f32.mrb[0].mxu0
    %v2044 = vadd.f32 %v1927, %v2043
    %v2045 = vpop.f32.mrb[0].mxu0
    %2046 = vmatprep.mubr.f32.mxu0 0.0
    %2047 = vmatmul.mubr.f32.gmra.mrb[0].mxu0 %v1933
    %v2048 = vpop.f32.mrb[0].mxu0
    %v2049 = vadd.f32 %v1927, %v2048
    %v2050 = vpop.f32.mrb[0].mxu0
    %2051 = vmatprep.mubr.f32.mxu0 0.0
    %2052 = vmatmul.mubr.f32.gmra.mrb[0].mxu0 %v1936
    %v2053 = vpop.f32.mrb[0].mxu0
    %v2054 = vadd.f32 %v1927, %v2053
    %v2055 = vpop.f32.mrb[0].mxu0
    %2056 = vmatprep.mubr.f32.mxu0 0.0
    %2057 = vmatmul.mubr.f32.gmra.mrb[0].mxu0 %v1939
    %v2058 = vpop.f32.mrb[0].mxu0
    %v2059 = vadd.f32 %v1927, %v2058
    %v2060 = vpop.f32.mrb[0].mxu0
    %2061 = vmatprep.mubr.f32.mxu0 0.0
    %2062 = vmatmul.mubr.f32.gmra.mrb[0].mxu0 %v1942
    %v2063 = vpop.f32.mrb[0].mxu0
    %v2064 = vadd.f32 %v1927, %v2063
    %v2065 = vpop.f32.mrb[0].mxu0
    %2066 = vmatprep.mubr.f32.mxu0 0.0
    %2067 = vmatmul.mubr.f32.gmra.mrb[0].mxu0 %v1945
    %v2068 = vpop.f32.mrb[0].mxu0
    %v2069 = vadd.f32 %v1927, %v2068
    %v2070 = vpop.f32.mrb[0].mxu0
    %2071 = vmatprep.mubr.f32.mxu0 0.0
    %2072 = vmatmul.mubr.f32.gmra.mrb[0].mxu0 %v1948
    %v2073 = vpop.f32.mrb[0].mxu0
    %v2074 = vadd.f32 %v1927, %v2073
    %v2075 = vpop.f32.mrb[0].mxu0
    %2076 = vmatprep.mubr.f32.mxu0 0.0
    %2077 = vmatmul.mubr.f32.gmra.mrb[0].mxu0 %v1951
    %v2078 = vpop.f32.mrb[0].mxu0
    %v2079 = vadd.f32 %v1927, %v2078
    %v2080 = vpop.f32.mrb[0].mxu0
    %2081 = vmatprep.mubr.f32.mxu0 0.0
    %2082 = vmatmul.mubr.f32.gmra.mrb[0].mxu0 %v1954
    %v2083 = vpop.f32.mrb[0].mxu0
    %v2084 = vadd.f32 %v1927, %v2083
    %v2085 = vpop.f32.mrb[0].mxu0
    %2086 = vmatprep.mubr.f32.mxu0 0.0
    %2087 = vmatmul.mubr.f32.gmra.mrb[0].mxu0 %v1957
    %v2088 = vpop.f32.mrb[0].mxu0
    %v2089 = vadd.f32 %v1927, %v2088
    %v2090 = vpop.f32.mrb[0].mxu0
    %2091 = vmatprep.mubr.f32.mxu0 0.0
    %2092 = vmatmul.mubr.f32.gmra.mrb[0].mxu0 %v1960
    %v2093 = vpop.f32.mrb[0].mxu0
    %v2094 = vadd.f32 %v1927, %v2093
    %v2095 = vpop.f32.mrb[0].mxu0
    %2096 = vmatprep.mubr.f32.mxu0 0.0
    %2097 = vmatmul.mubr.f32.gmra.mrb[0].mxu0 %v1963
    %v2098 = vpop.f32.mrb[0].mxu0
    %v2099 = vadd.f32 %v1927, %v2098
    %v2100 = vpop.f32.mrb[0].mxu0
    %2101 = vmatprep.mubr.f32.mxu0 0.0
    %2102 = vmatmul.mubr.f32.gmra.mrb[0].mxu0 %v1966
    %v2103 = vpop.f32.mrb[0].mxu0
    %v2104 = vadd.f32 %v1927, %v2103
    %v2105 = vpop.f32.mrb[0].mxu0
    %2106 = vmatprep.mubr.f32.mxu0 0.0
    %2107 = vmatmul.mubr.f32.gmra.mrb[0].mxu0 %v1969
    %v2108 = vpop.f32.mrb[0].mxu0
    %v2109 = vadd.f32 %v1927, %v2108
    %v2110 = vpop.f32.mrb[0].mxu0
    %2111 = vmatprep.mubr.f32.mxu0 0.0
    %2112 = vmatmul.mubr.f32.gmra.mrb[0].mxu0 %v1972
    %v2113 = vpop.f32.mrb[0].mxu0
    %v2114 = vadd.f32 %v1927, %v2113
    %v2115 = vpop.f32.mrb[0].mxu0
    %2116 = vmatprep.mubr.f32.mxu0 0.0
    %2117 = vmatmul.mubr.f32.gmra.mrb[0].mxu0 %v1975
    %v2118 = vpop.f32.mrb[0].mxu0
    %v2119 = vadd.f32 %v1927, %v2118
    %v2120 = vpop.f32.mrb[0].mxu0
    %2121 = vdwg.mxu0
    %2122 = vst.msk [vmem:[#allocation19] sm:$0xff] %vm1630, %v1351
    %2123 = vst.msk [vmem:[#allocation19 + $0x8] sm:$0xff] %vm1630, %v1356
    %2124 = vst.msk [vmem:[#allocation19 + $0x10] sm:$0xff] %vm1630, %v1361
    %2125 = vst.msk [vmem:[#allocation19 + $0x18] sm:$0xff] %vm1630, %v1366
    %2126 = vst.msk [vmem:[#allocation19 + $0x20] sm:$0xff] %vm1630, %v1371
    %2127 = vst.msk [vmem:[#allocation19 + $0x28] sm:$0xff] %vm1630, %v1376
    %2128 = vst.msk [vmem:[#allocation19 + $0x30] sm:$0xff] %vm1630, %v1381
    %2129 = vst.msk [vmem:[#allocation19 + $0x38] sm:$0xff] %vm1630, %v1386
    %2130 = vst.msk [vmem:[#allocation19 + $0x40] sm:$0xff] %vm1630, %v1391
    %2131 = vst.msk [vmem:[#allocation19 + $0x48] sm:$0xff] %vm1630, %v1396
    %2132 = vst.msk [vmem:[#allocation19 + $0x50] sm:$0xff] %vm1630, %v1401
    %2133 = vst.msk [vmem:[#allocation19 + $0x58] sm:$0xff] %vm1630, %v1406
    %2134 = vst.msk [vmem:[#allocation19 + $0x60] sm:$0xff] %vm1630, %v1411
    %2135 = vst.msk [vmem:[#allocation19 + $0x68] sm:$0xff] %vm1630, %v1416
    %2136 = vst.msk [vmem:[#allocation19 + $0x70] sm:$0xff] %vm1630, %v1421
    %2137 = vst.msk [vmem:[#allocation19 + $0x78] sm:$0xff] %vm1630, %v1426
    %2138 = vst.msk [vmem:[#allocation20] sm:$0xff] %vm1630, %v1544
    %2139 = vst.msk [vmem:[#allocation20 + $0x8] sm:$0xff] %vm1630, %v1549
    %2140 = vst.msk [vmem:[#allocation20 + $0x10] sm:$0xff] %vm1630, %v1554
    %2141 = vst.msk [vmem:[#allocation20 + $0x18] sm:$0xff] %vm1630, %v1559
    %2142 = vst.msk [vmem:[#allocation20 + $0x20] sm:$0xff] %vm1630, %v1564
    %2143 = vst.msk [vmem:[#allocation20 + $0x28] sm:$0xff] %vm1630, %v1569
    %2144 = vst.msk [vmem:[#allocation20 + $0x30] sm:$0xff] %vm1630, %v1574
    %2145 = vst.msk [vmem:[#allocation20 + $0x38] sm:$0xff] %vm1630, %v1579
    %2146 = vst.msk [vmem:[#allocation20 + $0x40] sm:$0xff] %vm1630, %v1584
    %2147 = vst.msk [vmem:[#allocation20 + $0x48] sm:$0xff] %vm1630, %v1589
    %2148 = vst.msk [vmem:[#allocation20 + $0x50] sm:$0xff] %vm1630, %v1594
    %2149 = vst.msk [vmem:[#allocation20 + $0x58] sm:$0xff] %vm1630, %v1599
    %2150 = vst.msk [vmem:[#allocation20 + $0x60] sm:$0xff] %vm1630, %v1604
    %2151 = vst.msk [vmem:[#allocation20 + $0x68] sm:$0xff] %vm1630, %v1609
    %2152 = vst.msk [vmem:[#allocation20 + $0x70] sm:$0xff] %vm1630, %v1614
    %2153 = vst.msk [vmem:[#allocation20 + $0x78] sm:$0xff] %vm1630, %v1619
    %vm2154 = vcmask 261120
    %2155 = vst.msk [vmem:[#allocation22] sm:$0xff] %vm2154, %v2044
    %2156 = vst.msk [vmem:[#allocation22 + $0x8] sm:$0xff] %vm2154, %v2049
    %2157 = vst.msk [vmem:[#allocation22 + $0x10] sm:$0xff] %vm2154, %v2054
    %2158 = vst.msk [vmem:[#allocation22 + $0x18] sm:$0xff] %vm2154, %v2059
    %2159 = vst.msk [vmem:[#allocation22 + $0x20] sm:$0xff] %vm2154, %v2064
    %2160 = vst.msk [vmem:[#allocation22 + $0x28] sm:$0xff] %vm2154, %v2069
    %2161 = vst.msk [vmem:[#allocation22 + $0x30] sm:$0xff] %vm2154, %v2074
    %2162 = vst.msk [vmem:[#allocation22 + $0x38] sm:$0xff] %vm2154, %v2079
    %2163 = vst.msk [vmem:[#allocation22 + $0x40] sm:$0xff] %vm2154, %v2084
    %2164 = vst.msk [vmem:[#allocation22 + $0x48] sm:$0xff] %vm2154, %v2089
    %2165 = vst.msk [vmem:[#allocation22 + $0x50] sm:$0xff] %vm2154, %v2094
    %2166 = vst.msk [vmem:[#allocation22 + $0x58] sm:$0xff] %vm2154, %v2099
    %2167 = vst.msk [vmem:[#allocation22 + $0x60] sm:$0xff] %vm2154, %v2104
    %2168 = vst.msk [vmem:[#allocation22 + $0x68] sm:$0xff] %vm2154, %v2109
    %2169 = vst.msk [vmem:[#allocation22 + $0x70] sm:$0xff] %vm2154, %v2114
    %2170 = vst.msk [vmem:[#allocation22 + $0x78] sm:$0xff] %vm2154, %v2119
    // Predicated region
    $region82: #{tpu_custom_call.1} parent=1 // pred_check
      _
    $region83: #{tpu_custom_call.1} parent=1 // pred_check_branch
      %2172 = sbr.rel (0) target = $region85
    $region84: #{tpu_custom_call.1} parent=1 // pred_region
      %s2174 = ssub.s32 2048, 2048
      %2175 = vsyncadd [#allocation4], %s2174
      %s2176 = sshll.u32 [#allocation19], 4
      %s2177 = int_to_ptr.vmem [resolvable:$true] %s2176
      %2182 = dma.vmem_to_hbm [thread:$0]  %s2177, 2048, %s10, [#allocation4], 128, 128, 8
    $region85: #{tpu_custom_call.1} parent=1 // pred_fallthru
      _
    // Predicated region
    $region86: #{tpu_custom_call.1} parent=1 // pred_check
      _
    $region87: #{tpu_custom_call.1} parent=1 // pred_check_branch
      %2184 = sbr.rel (0) target = $region89
    $region88: #{tpu_custom_call.1} parent=1 // pred_region
      %s2186 = ssub.s32 2048, 2048
      %2187 = vsyncadd [#allocation21], %s2186
      %s2188 = sshll.u32 [#allocation20], 4
      %s2189 = int_to_ptr.vmem [resolvable:$true] %s2188
      %2194 = dma.vmem_to_hbm [thread:$0]  %s2189, 2048, %s11, [#allocation21], 128, 128, 8
    $region89: #{tpu_custom_call.1} parent=1 // pred_fallthru
      _
    // Predicated region
    $region90: #{tpu_custom_call.1} parent=1 // pred_check
      _
    $region91: #{tpu_custom_call.1} parent=1 // pred_check_branch
      %2196 = sbr.rel (0) target = $region93
    $region92: #{tpu_custom_call.1} parent=1 // pred_region
      %s2198 = ssub.s32 2048, 2048
      %2199 = vsyncadd [#allocation21], %s2198
      %s2200 = sshll.u32 [#allocation22], 4
      %s2201 = int_to_ptr.vmem [resolvable:$true] %s2200
      %2206 = dma.vmem_to_hbm [thread:$0]  %s2201, 2048, %s12, [#allocation21], 128, 128, 8
    $region93: #{tpu_custom_call.1} parent=1 // pred_fallthru
      _
    // Predicated region
    $region94: #{tpu_custom_call.1} parent=1 // pred_check
      _
    $region95: #{tpu_custom_call.1} parent=1 // pred_check_branch
      %2208 = sbr.rel (0) target = $region97
    $region96: #{tpu_custom_call.1} parent=1 // pred_region
      %2209 = dma.done [#allocation4], 2048
    $region97: #{tpu_custom_call.1} parent=1 // pred_fallthru
      _
    // Predicated region
    $region98: #{tpu_custom_call.1} parent=1 // pred_check
      _
    $region99: #{tpu_custom_call.1} parent=1 // pred_check_branch
      %2211 = sbr.rel (0) target = $region101
    $region100: #{tpu_custom_call.1} parent=1 // pred_region
      %2212 = dma.done [#allocation21], 2048
    $region101: #{tpu_custom_call.1} parent=1 // pred_fallthru
      _
    // Predicated region
    $region102: #{tpu_custom_call.1} parent=1 // pred_check
      _
    $region103: #{tpu_custom_call.1} parent=1 // pred_check_branch
      %2214 = sbr.rel (0) target = $region105
    $region104: #{tpu_custom_call.1} parent=1 // pred_region
      %2215 = dma.done [#allocation21], 2048
    $region105: #{tpu_custom_call.1} parent=1 // pred_fallthru
      _
    %2216 = vsyncpa [#allocation3], 1
    %2217 = vsyncpa [#allocation6], 1
    %2218 = vsyncpa [#allocation9], 1
    %2219 = vsyncpa [#allocation12], 1
    %2220 = vsyncpa [#allocation15], 1
    %2221 = vsyncpa [#allocation18], 1
    %2222 = vsyncpa [#allocation4], 1
    %2223 = vsyncpa [#allocation21], 1

</llo_original>
